<compile_context>
chip_gen: v6e
topology: v6e:2x2x1
jax: 0.10.0
libtpu: 0.0.40
codegen_flags: <defaults>
</compile_context>

<pallas_src>
import functools

import numpy as np
import jax
import jax.numpy as jnp
from jax.experimental import pallas as pl
from jax.experimental.pallas import tpu as pltpu

LANE = 128   # padded channel width -> lane-dense vregs / full MXU columns
NMP = 8      # padded mask-head rows (real rows = num_masks)


# -----------------------------------------------------------------------------
# Pallas kernel 1: fused  [conv3x3/s2 + ReLU] -> [1x1 + ReLU] -> [1x1 + ReLU]
#                  -> [1x1 mask head], one (image, row-tile) per grid step.
# Inputs are pre-gathered conv taps [rt, 16*Cin]; outputs are channel-major.
# -----------------------------------------------------------------------------
def _qtseg_fused_kernel(x_ref, w_enc_ref, b_enc_ref, w_br_ref, b_br_ref,
                        w_emb_ref, b_emb_ref, w_mskT_ref, b_msk_ref,
                        emb_ref, msk_ref):
    cdt = w_br_ref.dtype                                    # bf16

    # encoder 3x3/s2: single K = 16*Cin dot (taps gathered wrapper-side)
    h = jnp.dot(x_ref[...], w_enc_ref[...], preferred_element_type=jnp.float32)
    h = jnp.maximum(h + b_enc_ref[...], 0.0)                # [rt, 128]

    # bridge: 1x1 conv + ReLU
    h = jnp.dot(h.astype(cdt), w_br_ref[...], preferred_element_type=jnp.float32)
    h = jnp.maximum(h + b_br_ref[...], 0.0)

    # mask_decoder embedding: 1x1 conv + ReLU
    emb = jnp.dot(h.astype(cdt), w_emb_ref[...], preferred_element_type=jnp.float32)
    emb = jnp.maximum(emb + b_emb_ref[...], 0.0)            # [rt, 128]

    # emit embeddings channel-major (final NCHW-flat layout, no wrapper re-read)
    c_emb = emb_ref.shape[0]
    emb_t = jnp.transpose(emb[:, :c_emb])                   # [c_emb, rt] f32
    emb_ref[...] = emb_t.astype(emb_ref.dtype)

    # mask head, transposed form: [NMP, c_emb] @ [c_emb, rt] (tiny MXU dot)
    msk = jnp.dot(w_mskT_ref[...], emb_t.astype(cdt),
                  preferred_element_type=jnp.float32) + b_msk_ref[...]
    msk_ref[...] = msk[:msk_ref.shape[0], :].astype(msk_ref.dtype)


def _pick_row_tile(R, target=2048):
    """Largest row tile that is a multiple of 128, divides R and <= target."""
    if R <= target:
        return R
    rt = (min(target, R) // 128) * 128
    while rt >= 128:
        if R % rt == 0:
            return rt
        rt -= 128
    # TODO(synk): pad R to a multiple of 128 instead of falling back to full R.
    return R


def qtseg_backbone(x_taps, params, c_emb, num_masks):
    """x_taps: [N, R, 16*Cin] bf16 -> (emb [N, c_emb, R] f32, masks [N, nm, R] bf16)."""
    N, R, ktot = x_taps.shape
    rt = _pick_row_tile(R)
    grid = (N, R // rt)
    wmap = lambda n, r: (0, 0)   # weights: constant block index -> DMA'd once

    return pl.pallas_call(
        _qtseg_fused_kernel,
        out_shape=(jax.ShapeDtypeStruct((N, c_emb, R), jnp.float32),
                   jax.ShapeDtypeStruct((N, num_masks, R), jnp.bfloat16)),
        grid_spec=pltpu.PrefetchScalarGridSpec(
            num_scalar_prefetch=0,
            grid=grid,
            in_specs=[
                pl.BlockSpec((pl.Squeezed(), rt, ktot), lambda n, r: (n, r, 0)),
                pl.BlockSpec((ktot, LANE), wmap),
                pl.BlockSpec((1, LANE), wmap),
                pl.BlockSpec((LANE, LANE), wmap),
                pl.BlockSpec((1, LANE), wmap),
                pl.BlockSpec((LANE, LANE), wmap),
                pl.BlockSpec((1, LANE), wmap),
                pl.BlockSpec((NMP, c_emb), wmap),
                pl.BlockSpec((NMP, 1), wmap),
            ],
            out_specs=[
                pl.BlockSpec((pl.Squeezed(), c_emb, rt), lambda n, r: (n, 0, r)),
                pl.BlockSpec((pl.Squeezed(), num_masks, rt), lambda n, r: (n, 0, r)),
            ],
        ),
        compiler_params=pltpu.CompilerParams(
            dimension_semantics=("parallel", "parallel"),
            vmem_limit_bytes=48 * 1024 * 1024),
    )(x_taps,
      params["enc_w"], params["enc_b"],
      params["br_w"], params["br_b"],
      params["emb_w"], params["emb_b"],
      params["mskT_w"], params["msk_b"])


# -----------------------------------------------------------------------------
# Pallas kernel 2: batched bilinear interpolation (align_corners=False) as two
# flat 2D bf16 matmuls (no broadcast of the interpolation matrices).
#   x arrives spatially transposed [B, Win, Hin]; out is [B, Hout, Wout].
# -----------------------------------------------------------------------------
def _bilinear_kernel(x_ref, ahT_ref, awT_ref, o_ref):
    bt, win, hin = x_ref.shape
    hout = ahT_ref.shape[1]
    wout = awT_ref.shape[1]
    # contract Hin:  u[b, w, o] = sum_h x[b, w, h] * A_h[o, h]
    x2 = x_ref[...].reshape(bt * win, hin)
    u = jnp.dot(x2, ahT_ref[...], preferred_element_type=jnp.float32)
    # minor-dims transpose, then contract Win: out[b, o, q] = sum_w u[b,o,w] A_w[q,w]
    u = jnp.transpose(u.reshape(bt, win, hout), (0, 2, 1))      # [bt, hout, win]
    u2 = u.reshape(bt * hout, win).astype(awT_ref.dtype)
    o = jnp.dot(u2, awT_ref[...], preferred_element_type=jnp.float32)
    o_ref[...] = o.reshape(bt, hout, wout).astype(o_ref.dtype)


def _bilinear_matrix(out_size, in_size):
    """Row-interp matrix matching torch bilinear, align_corners=False."""
    scale = in_size / out_size
    o = np.arange(out_size, dtype=np.float64)
    src = (o + 0.5) * scale - 0.5
    src = np.maximum(src, 0.0)
    i0 = np.minimum(np.floor(src).astype(np.int64), in_size - 1)
    i1 = np.minimum(i0 + 1, in_size - 1)
    w1 = src - i0
    w0 = 1.0 - w1
    A = np.zeros((out_size, in_size), dtype=np.float32)
    A[np.arange(out_size), i0] += w0.astype(np.float32)
    A[np.arange(out_size), i1] += w1.astype(np.float32)
    return A


def _pick_bt(B, per_elem_bytes, budget=24 * 1024 * 1024):
    cap = max(1, min(B, budget // max(per_elem_bytes, 1)))
    for bt in range(int(cap), 0, -1):
        if B % bt == 0:
            return bt
    return 1


def bilinear_resize(x_bwh, out_h, out_w):
    """x_bwh: [B, Win, Hin] (spatially transposed, bf16) -> [B, out_h, out_w] f32."""
    B, Win, Hin = x_bwh.shape
    ahT = jnp.asarray(_bilinear_matrix(out_h, Hin).T, jnp.bfloat16)  # [Hin, Hout]
    awT = jnp.asarray(_bilinear_matrix(out_w, Win).T, jnp.bfloat16)  # [Win, Wout]
    per_elem = (2 * Win * Hin * 2          # input block, bf16, double-buffered
                + 2 * out_h * out_w * 4    # output block, f32, double-buffered
                + 3 * Win * out_h * 4)     # intermediate + transposed copy
    bt = _pick_bt(B, per_elem)
    return pl.pallas_call(
        _bilinear_kernel,
        out_shape=jax.ShapeDtypeStruct((B, out_h, out_w), jnp.float32),
        grid_spec=pltpu.PrefetchScalarGridSpec(
            num_scalar_prefetch=0,
            grid=(B // bt,),
            in_specs=[
                pl.BlockSpec((bt, Win, Hin), lambda b: (b, 0, 0)),
                pl.BlockSpec((Hin, out_h), lambda b: (0, 0)),
                pl.BlockSpec((Win, out_w), lambda b: (0, 0)),
            ],
            out_specs=pl.BlockSpec((bt, out_h, out_w), lambda b: (b, 0, 0)),
        ),
        compiler_params=pltpu.CompilerParams(
            dimension_semantics=("parallel",),
            vmem_limit_bytes=48 * 1024 * 1024),
    )(x_bwh, ahT, awT)


# -----------------------------------------------------------------------------
# Deterministic parameter initialization (synthetic weights), packed for the
# wrapper's 2x2-window tap gather and padded to 128 lanes.
# -----------------------------------------------------------------------------
def init_params(key, c_in, c_enc=32, c_emb=32, num_masks=2):
    assert c_enc <= LANE and c_emb <= LANE and num_masks <= NMP
    ks = jax.random.split(key, 8)

    def w(k, shape, fan_in):
        return np.asarray(jax.random.normal(k, shape, jnp.float32)) / np.sqrt(fan_in)

    enc_w = w(ks[0], (3, 3, c_in, c_enc), 9 * c_in)   # (kh, kw, ci, co)
    enc_b = 0.1 * w(ks[1], (c_enc,), 1.0)
    br_w = w(ks[2], (c_enc, c_enc), c_enc)
    br_b = 0.1 * w(ks[3], (c_enc,), 1.0)
    emb_w = w(ks[4], (c_enc, c_emb), c_enc)
    emb_b = 0.1 * w(ks[5], (c_emb,), 1.0)
    msk_w = w(ks[6], (c_emb, num_masks), c_emb)
    msk_b = 0.1 * w(ks[7], (num_masks,), 1.0)

    # Repack 3x3/s2 conv weight into ONE [16*c_in, LANE] matrix matching the
    # wrapper's 2x2-window tap concat: tap block (di, dj), sub-pixel (ph, pw)
    # corresponds to conv tap (kh, kw) = (2*di+ph, 2*dj+pw); kh==3 / kw==3 -> 0.
    enc_packed = np.zeros((16 * c_in, LANE), np.float32)
    for di in range(2):
        for dj in range(2):
            for ph in range(2):
                for pw in range(2):
                    kh, kw = 2 * di + ph, 2 * dj + pw
                    if kh < 3 and kw < 3:
                        r0 = ((di * 2 + dj) * 4 + ph * 2 + pw) * c_in
                        enc_packed[r0:r0 + c_in, :c_enc] = enc_w[kh, kw]

    def pad_mat(m):
        out = np.zeros((LANE, LANE), np.float32)
        out[:m.shape[0], :m.shape[1]] = m
        return out

    def pad_vec(v):
        out = np.zeros((1, LANE), np.float32)
        out[0, :v.shape[0]] = v
        return out

    mskT = np.zeros((NMP, c_emb), np.float32)
    mskT[:num_masks] = msk_w.T
    msk_b_col = np.zeros((NMP, 1), np.float32)
    msk_b_col[:num_masks, 0] = msk_b

    cdt = jnp.bfloat16
    return {
        "enc_w": jnp.asarray(enc_packed, cdt),
        "enc_b": jnp.asarray(pad_vec(enc_b)),
        "br_w": jnp.asarray(pad_mat(br_w), cdt),
        "br_b": jnp.asarray(pad_vec(br_b)),
        "emb_w": jnp.asarray(pad_mat(emb_w), cdt),
        "emb_b": jnp.asarray(pad_vec(emb_b)),
        "mskT_w": jnp.asarray(mskT, cdt),
        "msk_b": jnp.asarray(msk_b_col),
    }


# -----------------------------------------------------------------------------
# QTSeg forward
# -----------------------------------------------------------------------------
@functools.partial(jax.jit, static_argnames=("c_emb", "num_masks"))
def qtseg_forward(x_nchw, params, *, c_emb=32, num_masks=2):
    N, C, H, W = x_nchw.shape
    assert H % 2 == 0 and W % 2 == 0
    Ho, Wo = H // 2, W // 2
    R = Ho * Wo

    # XLA-side prep: NCHW -> NHWC bf16, pad 1, space-to-depth, 2x2-window tap
    # concat -> x_taps[n, i*Wo+j, :] = flattened 4x4 padded window at (2i, 2j).
    x_nhwc = jnp.transpose(x_nchw, (0, 2, 3, 1)).astype(jnp.bfloat16)
    xp = jnp.pad(x_nhwc, ((0, 0), (1, 1), (1, 1), (0, 0)))
    xs = xp.reshape(N, Ho + 1, 2, Wo + 1, 2, C)
    xs = jnp.transpose(xs, (0, 1, 3, 2, 4, 5)).reshape(N, Ho + 1, Wo + 1, 4 * C)
    taps = [xs[:, di:di + Ho, dj:dj + Wo, :]
            for di, dj in ((0, 0), (0, 1), (1, 0), (1, 1))]
    x_taps = jnp.concatenate(taps, axis=-1).reshape(N, R, 16 * C)

    # Fused encoder + bridge + mask_decoder (row-tiled, channel-major outputs).
    emb_flat, msk_flat = qtseg_backbone(x_taps, params, c_emb, num_masks)
    mask_embeddings = emb_flat.reshape(N, c_emb, Ho, Wo)        # NCHW f32

    # Low-res mask logits are tiny; transpose spatially so the bilinear kernel
    # is two plain 2D matmuls.
    low_res = msk_flat.reshape(N, num_masks, Ho, Wo)
    masks_bwh = jnp.transpose(low_res, (0, 1, 3, 2)).reshape(
        N * num_masks, Wo, Ho)                                  # bf16

    # F.interpolate(..., size=(H, W), mode='bilinear', align_corners=False)
    ori = bilinear_resize(masks_bwh, H, W)                      # [N*nm, H, W] f32
    ori_res_masks = ori.reshape(N, num_masks, H, W)
    return ori_res_masks, mask_embeddings


if __name__ == "__main__":
    key = jax.random.PRNGKey(0)
    kx, kp = jax.random.split(key)
    x = jax.random.normal(kx, (2, 4, 16, 16), jnp.float32)      # NCHW input
    params = init_params(kp, c_in=4, c_enc=32, c_emb=32, num_masks=2)

    ori_res_masks, mask_embeddings = qtseg_forward(x, params, c_emb=32,
                                                   num_masks=2)
    jax.block_until_ready((ori_res_masks, mask_embeddings))

    assert ori_res_masks.shape == (2, 2, 16, 16), ori_res_masks.shape
    assert mask_embeddings.shape == (2, 32, 8, 8), mask_embeddings.shape
    assert ori_res_masks.dtype == jnp.float32
    assert mask_embeddings.dtype == jnp.float32
    assert bool(jnp.all(jnp.isfinite(ori_res_masks)))
    assert bool(jnp.all(jnp.isfinite(mask_embeddings)))
    assert bool(jnp.all(mask_embeddings >= 0))                  # ReLU output
    print("KERNEL_OK")
</pallas_src>

<mosaic_0001>
module attributes {stable_mosaic.version = 11 : i64} {
  func.func @_qtseg_fused_kernel(%arg0: i32, %arg1: i32, %arg2: memref<1x64x64xbf16, #tpu.memory_space<vmem>>, %arg3: memref<64x128xbf16, #tpu.memory_space<vmem>>, %arg4: memref<1x128xf32, #tpu.memory_space<vmem>>, %arg5: memref<128x128xbf16, #tpu.memory_space<vmem>>, %arg6: memref<1x128xf32, #tpu.memory_space<vmem>>, %arg7: memref<128x128xbf16, #tpu.memory_space<vmem>>, %arg8: memref<1x128xf32, #tpu.memory_space<vmem>>, %arg9: memref<8x32xbf16, #tpu.memory_space<vmem>>, %arg10: memref<8x1xf32, #tpu.memory_space<vmem>>, %arg11: memref<1x32x64xf32, #tpu.memory_space<vmem>>, %arg12: memref<1x2x64xbf16, #tpu.memory_space<vmem>>) attributes {dimension_semantics = [#tpu.dimension_semantics<parallel>, #tpu.dimension_semantics<parallel>], iteration_bounds = array<i64: 2, 1>, scalar_prefetch = 0 : i64, scratch_operands = 0 : i64, tpu.core_type = #tpu.core_type<tc>, window_params = [{transform_indices = @transform_0, window_bounds = array<i64: 1, 64, 64>}, {pipeline_mode = #tpu.pipeline_mode<synchronous>, transform_indices = @transform_1, window_bounds = array<i64: 64, 128>}, {pipeline_mode = #tpu.pipeline_mode<synchronous>, transform_indices = @transform_2, window_bounds = array<i64: 1, 128>}, {pipeline_mode = #tpu.pipeline_mode<synchronous>, transform_indices = @transform_3, window_bounds = array<i64: 128, 128>}, {pipeline_mode = #tpu.pipeline_mode<synchronous>, transform_indices = @transform_4, window_bounds = array<i64: 1, 128>}, {pipeline_mode = #tpu.pipeline_mode<synchronous>, transform_indices = @transform_5, window_bounds = array<i64: 128, 128>}, {pipeline_mode = #tpu.pipeline_mode<synchronous>, transform_indices = @transform_6, window_bounds = array<i64: 1, 128>}, {pipeline_mode = #tpu.pipeline_mode<synchronous>, transform_indices = @transform_7, window_bounds = array<i64: 8, 32>}, {pipeline_mode = #tpu.pipeline_mode<synchronous>, transform_indices = @transform_8, window_bounds = array<i64: 8, 1>}, {transform_indices = @transform_9, window_bounds = array<i64: 1, 32, 64>}, {transform_indices = @transform_10, window_bounds = array<i64: 1, 2, 64>}]} {
    %c0 = arith.constant 0 : index
    %c0_0 = arith.constant 0 : index
    %c0_1 = arith.constant 0 : index
    %0 = vector.load %arg2[%c0, %c0_0, %c0_1] : memref<1x64x64xbf16, #tpu.memory_space<vmem>>, vector<1x64x64xbf16>
    %1 = vector.shape_cast %0 : vector<1x64x64xbf16> to vector<64x64xbf16>
    %c0_2 = arith.constant 0 : index
    %c0_3 = arith.constant 0 : index
    %2 = vector.load %arg3[%c0_2, %c0_3] : memref<64x128xbf16, #tpu.memory_space<vmem>>, vector<64x128xbf16>
    %cst = arith.constant dense<0.000000e+00> : vector<64x128xf32>
    %3 = tpu.matmul %1, %2, %cst {dimension_numbers = #tpu.dot_dimension_numbers<[1], [0], [0], [1], [0, 0, 1, 1], [], []>} : vector<64x64xbf16>, vector<64x128xbf16>, vector<64x128xf32> -> vector<64x128xf32>
    %c0_4 = arith.constant 0 : index
    %c0_5 = arith.constant 0 : index
    %4 = vector.load %arg4[%c0_4, %c0_5] : memref<1x128xf32, #tpu.memory_space<vmem>>, vector<1x128xf32>
    %5 = vector.broadcast %4 : vector<1x128xf32> to vector<64x128xf32>
    %6 = arith.addf %3, %5 : vector<64x128xf32>
    %cst_6 = arith.constant 0.000000e+00 : f32
    %7 = vector.broadcast %cst_6 : f32 to vector<64x128xf32>
    %8 = arith.maximumf %6, %7 : vector<64x128xf32>
    %9 = arith.truncf %8 : vector<64x128xf32> to vector<64x128xbf16>
    %c0_7 = arith.constant 0 : index
    %c0_8 = arith.constant 0 : index
    %10 = vector.load %arg5[%c0_7, %c0_8] : memref<128x128xbf16, #tpu.memory_space<vmem>>, vector<128x128xbf16>
    %cst_9 = arith.constant dense<0.000000e+00> : vector<64x128xf32>
    %11 = tpu.matmul %9, %10, %cst_9 {dimension_numbers = #tpu.dot_dimension_numbers<[1], [0], [0], [1], [0, 0, 1, 1], [], []>} : vector<64x128xbf16>, vector<128x128xbf16>, vector<64x128xf32> -> vector<64x128xf32>
    %c0_10 = arith.constant 0 : index
    %c0_11 = arith.constant 0 : index
    %12 = vector.load %arg6[%c0_10, %c0_11] : memref<1x128xf32, #tpu.memory_space<vmem>>, vector<1x128xf32>
    %13 = vector.broadcast %12 : vector<1x128xf32> to vector<64x128xf32>
    %14 = arith.addf %11, %13 : vector<64x128xf32>
    %cst_12 = arith.constant 0.000000e+00 : f32
    %15 = vector.broadcast %cst_12 : f32 to vector<64x128xf32>
    %16 = arith.maximumf %14, %15 : vector<64x128xf32>
    %17 = arith.truncf %16 : vector<64x128xf32> to vector<64x128xbf16>
    %c0_13 = arith.constant 0 : index
    %c0_14 = arith.constant 0 : index
    %18 = vector.load %arg7[%c0_13, %c0_14] : memref<128x128xbf16, #tpu.memory_space<vmem>>, vector<128x128xbf16>
    %cst_15 = arith.constant dense<0.000000e+00> : vector<64x128xf32>
    %19 = tpu.matmul %17, %18, %cst_15 {dimension_numbers = #tpu.dot_dimension_numbers<[1], [0], [0], [1], [0, 0, 1, 1], [], []>} : vector<64x128xbf16>, vector<128x128xbf16>, vector<64x128xf32> -> vector<64x128xf32>
    %c0_16 = arith.constant 0 : index
    %c0_17 = arith.constant 0 : index
    %20 = vector.load %arg8[%c0_16, %c0_17] : memref<1x128xf32, #tpu.memory_space<vmem>>, vector<1x128xf32>
    %21 = vector.broadcast %20 : vector<1x128xf32> to vector<64x128xf32>
    %22 = arith.addf %19, %21 : vector<64x128xf32>
    %cst_18 = arith.constant 0.000000e+00 : f32
    %23 = vector.broadcast %cst_18 : f32 to vector<64x128xf32>
    %24 = arith.maximumf %22, %23 : vector<64x128xf32>
    %25 = vector.extract_strided_slice %24 {offsets = [0, 0], sizes = [64, 32], strides = [1, 1]} : vector<64x128xf32> to vector<64x32xf32>
    %26 = tpu.transpose %25, [1, 0] : vector<64x32xf32> -> vector<32x64xf32>
    %c0_19 = arith.constant 0 : index
    %c0_20 = arith.constant 0 : index
    %c0_21 = arith.constant 0 : index
    %27 = vector.load %arg11[%c0_19, %c0_20, %c0_21] : memref<1x32x64xf32, #tpu.memory_space<vmem>>, vector<1x32x64xf32>
    %28 = vector.shape_cast %27 : vector<1x32x64xf32> to vector<32x64xf32>
    %29 = vector.shape_cast %26 : vector<32x64xf32> to vector<1x32x64xf32>
    tpu.vector_store %arg11[%c0_19, %c0_20, %c0_21], %29 {strides = array<i32>} : memref<1x32x64xf32, #tpu.memory_space<vmem>>, vector<1x32x64xf32>,
    %c0_22 = arith.constant 0 : index
    %c0_23 = arith.constant 0 : index
    %30 = vector.load %arg9[%c0_22, %c0_23] : memref<8x32xbf16, #tpu.memory_space<vmem>>, vector<8x32xbf16>
    %31 = arith.truncf %26 : vector<32x64xf32> to vector<32x64xbf16>
    %cst_24 = arith.constant dense<0.000000e+00> : vector<8x64xf32>
    %32 = tpu.matmul %30, %31, %cst_24 {dimension_numbers = #tpu.dot_dimension_numbers<[1], [0], [0], [1], [0, 0, 1, 1], [], []>} : vector<8x32xbf16>, vector<32x64xbf16>, vector<8x64xf32> -> vector<8x64xf32>
    %c0_25 = arith.constant 0 : index
    %c0_26 = arith.constant 0 : index
    %33 = vector.load %arg10[%c0_25, %c0_26] : memref<8x1xf32, #tpu.memory_space<vmem>>, vector<8x1xf32>
    %34 = vector.broadcast %33 : vector<8x1xf32> to vector<8x64xf32>
    %35 = arith.addf %32, %34 : vector<8x64xf32>
    %36 = vector.extract_strided_slice %35 {offsets = [0, 0], sizes = [2, 64], strides = [1, 1]} : vector<8x64xf32> to vector<2x64xf32>
    %37 = arith.truncf %36 : vector<2x64xf32> to vector<2x64xbf16>
    %c0_27 = arith.constant 0 : index
    %c0_28 = arith.constant 0 : index
    %c0_29 = arith.constant 0 : index
    %38 = vector.load %arg12[%c0_27, %c0_28, %c0_29] : memref<1x2x64xbf16, #tpu.memory_space<vmem>>, vector<1x2x64xbf16>
    %39 = vector.shape_cast %38 : vector<1x2x64xbf16> to vector<2x64xbf16>
    %40 = vector.shape_cast %37 : vector<2x64xbf16> to vector<1x2x64xbf16>
    tpu.vector_store %arg12[%c0_27, %c0_28, %c0_29], %40 {strides = array<i32>} : memref<1x2x64xbf16, #tpu.memory_space<vmem>>, vector<1x2x64xbf16>,
    return
  }
  func.func @transform_0(%arg0: i32, %arg1: i32) -> (i32, i32, i32) {
    %c0_i32 = arith.constant 0 : i32
    %c0_i32_0 = arith.constant 0 : i32
    return %arg0, %arg1, %c0_i32 : i32, i32, i32
  }
  func.func @transform_1(%arg0: i32, %arg1: i32) -> (i32, i32) {
    %c0_i32 = arith.constant 0 : i32
    %c0_i32_0 = arith.constant 0 : i32
    %c0_i32_1 = arith.constant 0 : i32
    return %c0_i32, %c0_i32_0 : i32, i32
  }
  func.func @transform_2(%arg0: i32, %arg1: i32) -> (i32, i32) {
    %c0_i32 = arith.constant 0 : i32
    %c0_i32_0 = arith.constant 0 : i32
    %c0_i32_1 = arith.constant 0 : i32
    return %c0_i32, %c0_i32_0 : i32, i32
  }
  func.func @transform_3(%arg0: i32, %arg1: i32) -> (i32, i32) {
    %c0_i32 = arith.constant 0 : i32
    %c0_i32_0 = arith.constant 0 : i32
    %c0_i32_1 = arith.constant 0 : i32
    return %c0_i32, %c0_i32_0 : i32, i32
  }
  func.func @transform_4(%arg0: i32, %arg1: i32) -> (i32, i32) {
    %c0_i32 = arith.constant 0 : i32
    %c0_i32_0 = arith.constant 0 : i32
    %c0_i32_1 = arith.constant 0 : i32
    return %c0_i32, %c0_i32_0 : i32, i32
  }
  func.func @transform_5(%arg0: i32, %arg1: i32) -> (i32, i32) {
    %c0_i32 = arith.constant 0 : i32
    %c0_i32_0 = arith.constant 0 : i32
    %c0_i32_1 = arith.constant 0 : i32
    return %c0_i32, %c0_i32_0 : i32, i32
  }
  func.func @transform_6(%arg0: i32, %arg1: i32) -> (i32, i32) {
    %c0_i32 = arith.constant 0 : i32
    %c0_i32_0 = arith.constant 0 : i32
    %c0_i32_1 = arith.constant 0 : i32
    return %c0_i32, %c0_i32_0 : i32, i32
  }
  func.func @transform_7(%arg0: i32, %arg1: i32) -> (i32, i32) {
    %c0_i32 = arith.constant 0 : i32
    %c0_i32_0 = arith.constant 0 : i32
    %c0_i32_1 = arith.constant 0 : i32
    return %c0_i32, %c0_i32_0 : i32, i32
  }
  func.func @transform_8(%arg0: i32, %arg1: i32) -> (i32, i32) {
    %c0_i32 = arith.constant 0 : i32
    %c0_i32_0 = arith.constant 0 : i32
    %c0_i32_1 = arith.constant 0 : i32
    return %c0_i32, %c0_i32_0 : i32, i32
  }
  func.func @transform_9(%arg0: i32, %arg1: i32) -> (i32, i32, i32) {
    %c0_i32 = arith.constant 0 : i32
    %c0_i32_0 = arith.constant 0 : i32
    return %arg0, %c0_i32, %arg1 : i32, i32, i32
  }
  func.func @transform_10(%arg0: i32, %arg1: i32) -> (i32, i32, i32) {
    %c0_i32 = arith.constant 0 : i32
    %c0_i32_0 = arith.constant 0 : i32
    return %arg0, %c0_i32, %arg1 : i32, i32, i32
  }
}

module attributes {stable_mosaic.version = 11 : i64} {
  func.func @_bilinear_kernel(%arg0: i32, %arg1: memref<4x8x8xbf16, #tpu.memory_space<vmem>>, %arg2: memref<8x16xbf16, #tpu.memory_space<vmem>>, %arg3: memref<8x16xbf16, #tpu.memory_space<vmem>>, %arg4: memref<4x16x16xf32, #tpu.memory_space<vmem>>) attributes {dimension_semantics = [#tpu.dimension_semantics<parallel>], iteration_bounds = array<i64: 1>, scalar_prefetch = 0 : i64, scratch_operands = 0 : i64, tpu.core_type = #tpu.core_type<tc>, window_params = [{transform_indices = @transform_0, window_bounds = array<i64: 4, 8, 8>}, {pipeline_mode = #tpu.pipeline_mode<synchronous>, transform_indices = @transform_1, window_bounds = array<i64: 8, 16>}, {pipeline_mode = #tpu.pipeline_mode<synchronous>, transform_indices = @transform_2, window_bounds = array<i64: 8, 16>}, {transform_indices = @transform_3, window_bounds = array<i64: 4, 16, 16>}]} {
    %c0 = arith.constant 0 : index
    %c0_0 = arith.constant 0 : index
    %c0_1 = arith.constant 0 : index
    %0 = vector.load %arg1[%c0, %c0_0, %c0_1] : memref<4x8x8xbf16, #tpu.memory_space<vmem>>, vector<4x8x8xbf16>
    %1 = vector.shape_cast %0 : vector<4x8x8xbf16> to vector<32x8xbf16>
    %c0_2 = arith.constant 0 : index
    %c0_3 = arith.constant 0 : index
    %2 = vector.load %arg2[%c0_2, %c0_3] : memref<8x16xbf16, #tpu.memory_space<vmem>>, vector<8x16xbf16>
    %cst = arith.constant dense<0.000000e+00> : vector<32x16xf32>
    %3 = tpu.matmul %1, %2, %cst {dimension_numbers = #tpu.dot_dimension_numbers<[1], [0], [0], [1], [0, 0, 1, 1], [], []>} : vector<32x8xbf16>, vector<8x16xbf16>, vector<32x16xf32> -> vector<32x16xf32>
    %4 = vector.shape_cast %3 : vector<32x16xf32> to vector<4x8x16xf32>
    %5 = tpu.transpose %4, [0, 2, 1] : vector<4x8x16xf32> -> vector<4x16x8xf32>
    %6 = vector.shape_cast %5 : vector<4x16x8xf32> to vector<64x8xf32>
    %7 = arith.truncf %6 : vector<64x8xf32> to vector<64x8xbf16>
    %c0_4 = arith.constant 0 : index
    %c0_5 = arith.constant 0 : index
    %8 = vector.load %arg3[%c0_4, %c0_5] : memref<8x16xbf16, #tpu.memory_space<vmem>>, vector<8x16xbf16>
    %cst_6 = arith.constant dense<0.000000e+00> : vector<64x16xf32>
    %9 = tpu.matmul %7, %8, %cst_6 {dimension_numbers = #tpu.dot_dimension_numbers<[1], [0], [0], [1], [0, 0, 1, 1], [], []>} : vector<64x8xbf16>, vector<8x16xbf16>, vector<64x16xf32> -> vector<64x16xf32>
    %10 = vector.shape_cast %9 : vector<64x16xf32> to vector<4x16x16xf32>
    %c0_7 = arith.constant 0 : index
    %c0_8 = arith.constant 0 : index
    %c0_9 = arith.constant 0 : index
    %11 = vector.load %arg4[%c0_7, %c0_8, %c0_9] : memref<4x16x16xf32, #tpu.memory_space<vmem>>, vector<4x16x16xf32>
    tpu.vector_store %arg4[%c0_7, %c0_8, %c0_9], %10 {strides = array<i32>} : memref<4x16x16xf32, #tpu.memory_space<vmem>>, vector<4x16x16xf32>,
    return
  }
  func.func @transform_0(%arg0: i32) -> (i32, i32, i32) {
    %c0_i32 = arith.constant 0 : i32
    %c0_i32_0 = arith.constant 0 : i32
    %c0_i32_1 = arith.constant 0 : i32
    return %arg0, %c0_i32, %c0_i32_0 : i32, i32, i32
  }
  func.func @transform_1(%arg0: i32) -> (i32, i32) {
    %c0_i32 = arith.constant 0 : i32
    %c0_i32_0 = arith.constant 0 : i32
    %c0_i32_1 = arith.constant 0 : i32
    return %c0_i32, %c0_i32_0 : i32, i32
  }
  func.func @transform_2(%arg0: i32) -> (i32, i32) {
    %c0_i32 = arith.constant 0 : i32
    %c0_i32_0 = arith.constant 0 : i32
    %c0_i32_1 = arith.constant 0 : i32
    return %c0_i32, %c0_i32_0 : i32, i32
  }
  func.func @transform_3(%arg0: i32) -> (i32, i32, i32) {
    %c0_i32 = arith.constant 0 : i32
    %c0_i32_0 = arith.constant 0 : i32
    %c0_i32_1 = arith.constant 0 : i32
    return %arg0, %c0_i32, %c0_i32_0 : i32, i32, i32
  }
}

</mosaic_0001>

<llo_original>
// kernel: qtseg_forward.3
$region0: #{qtseg_forward.3}
  #allocation0 [shape = 'u32[]', space=smem, size = 0x4, offset = 0x4, fixed_abs, tag = 'smem constant byte address 0x4 - core index']
  #allocation1 [shape = 'u32[144,128]{1,0:T(1,128)}', space=vmem, size = 0x12000, scoped, tag = 'internal scratch']
  %s0 = inlined_call_operand.vmem [shape: bf16[4,8,8], index: 0, kind: input, shape index: {}]
  %s1 = inlined_call_operand.vmem [shape: bf16[8,16], index: 1, kind: input, shape index: {}, may-alias: {1,2}]
  %s2 = inlined_call_operand.vmem [shape: bf16[8,16], index: 2, kind: input, shape index: {}, may-alias: {1,2}]
  %s3 = inlined_call_operand.hbm [shape: f32[4,16,16], index: 3, kind: output, shape index: {}]
  %s4 = sld [smem:[#allocation0]]
  $region22: #{qtseg_forward.3} parent=0
    _
  %s6 = ssub.s32 1, %s4
  %s7 = scalar_select 0, %s6, %s4
  $region1: #{qtseg_forward.3} parent=0
    #allocation2 [shape = 'u8[32768]{0}', space=vmem, size = 0x8000, scoped, tag = 'output window, operand 0, single buffered']
    #allocation3 [shape = 's32[1]{0}', space=sflag, size = 0x4, scoped, tag = 'scoped memory for qtseg_forward.3']
    %8 = vsyncpa [#allocation3], 0
    // Predicated region
    $region2: #{qtseg_forward.3} parent=1 // pred_check
      _
    $region3: #{qtseg_forward.3} parent=1 // pred_check_branch
      %10 = sbr.rel (0) target = $region5
    $region4: #{qtseg_forward.3} parent=1 // pred_region
      _
    $region5: #{qtseg_forward.3} parent=1 // pred_fallthru
      _
    // Predicated region
    $region6: #{qtseg_forward.3} parent=1 // pred_check
      _
    $region7: #{qtseg_forward.3} parent=1 // pred_check_branch
      %12 = sbr.rel (0) target = $region9
    $region8: #{qtseg_forward.3} parent=1 // pred_region
      _
    $region9: #{qtseg_forward.3} parent=1 // pred_fallthru
      _
    // Predicated region
    $region10: #{qtseg_forward.3} parent=1 // pred_check
      _
    $region11: #{qtseg_forward.3} parent=1 // pred_check_branch
      %14 = sbr.rel (0) target = $region13
    $region12: #{qtseg_forward.3} parent=1 // pred_region
      _
    $region13: #{qtseg_forward.3} parent=1 // pred_fallthru
      _
    %v16 = vld [vmem:[%s0] sm:$0xf]
    %v17 = vld [vmem:[%s0 + $0x4] sm:$0xf]
    %v18 = vld [vmem:[%s0 + $0x8] sm:$0xf]
    %v19 = vld [vmem:[%s0 + $0xc] sm:$0xf]
    %v20 = vld [vmem:[%s1] sm:$0xf]
    %v25 = vunpack.c.l.b16 %v16
    %v26 = vunpack.c.l.b16 %v17
    %v27 = vunpack.c.l.b16 %v18
    %v28 = vunpack.c.l.b16 %v19
    %v29 = vpack.c.b16 %v26, %v25
    %v30 = vpack.c.b16 %v28, %v27
    %vm31 = vcmask 64512
    %v33 = vsel %vm31, %v29, 0
    %v36 = vsel %vm31, %v30, 0
    %vm38 = vcmask 1043456
    %v40 = vsel %vm38, %v20, 0
    %42 = vmatprep.subr.bf16.mxu0 0
    %43 = vmatpush1.bf16.msra.mxu0 0
    %44 = vmatprep.subr.bf16.mxu0 0
    %45 = vmatpush1.bf16.msra.mxu0 0
    %46 = vmatprep.subr.bf16.mxu0 0
    %47 = vmatpush1.bf16.msra.mxu0 0
    %48 = vmatprep.subr.bf16.mxu0 0
    %49 = vmatpush1.bf16.msra.mxu0 0
    %50 = vmatprep.subr.bf16.mxu0 0
    %51 = vmatpush1.bf16.msra.mxu0 0
    %52 = vmatprep.subr.bf16.mxu0 0
    %53 = vmatpush1.bf16.msra.mxu0 0
    %54 = vmatprep.subr.bf16.mxu0 0
    %55 = vmatpush1.bf16.msra.mxu0 0
    %56 = vmatprep.subr.bf16.mxu0 0
    %57 = vmatpush1.bf16.msra.mxu0 %v40
    %58 = vmatprep.subr.bf16.mxu0 0
    %59 = vmatpush2.bf16.msra.mxu0 0
    %60 = vmatprep.subr.bf16.mxu0 0
    %61 = vmatpush2.bf16.msra.mxu0 0
    %62 = vmatprep.subr.bf16.mxu0 0
    %63 = vmatpush2.bf16.msra.mxu0 0
    %64 = vmatprep.subr.bf16.mxu0 0
    %65 = vmatpush2.bf16.msra.mxu0 0
    %66 = vmatprep.subr.bf16.mxu0 0
    %67 = vmatpush2.bf16.msra.mxu0 0
    %68 = vmatprep.subr.bf16.mxu0 0
    %69 = vmatpush2.bf16.msra.mxu0 0
    %70 = vmatprep.subr.bf16.mxu0 0
    %71 = vmatpush2.bf16.msra.mxu0 0
    %72 = vmatprep.subr.bf16.mxu0 0
    %73 = vmatpush2.bf16.msra.mxu0 0
    %74 = vmatprep.mubr.bf16.mxu0 0
    %75 = vmatmul.mubr.bf16.gmra.mxu0 %v33
    %v76 = vpop.f32.mrf.mxu0
    %v77 = vadd.f32 0.0, %v76
    %v78 = vpop.f32.mrf.mxu0
    %v79 = vpop.f32.mrf.mxu0
    %v80 = vadd.f32 0.0, %v79
    %v81 = vpop.f32.mrf.mxu0
    %82 = vmatprep.mubr.bf16.mxu0 0
    %83 = vmatmul.mubr.bf16.gmra.mxu0 %v36
    %v84 = vpop.f32.mrf.mxu0
    %v85 = vadd.f32 0.0, %v84
    %v86 = vpop.f32.mrf.mxu0
    %v87 = vpop.f32.mrf.mxu0
    %v88 = vadd.f32 0.0, %v87
    %v89 = vpop.f32.mrf.mxu0
    %90 = vdwg.mxu0
    %91 = vxpose.xlu0.b32.start [1/16] %v77, 128
    %92 = vxpose.xlu0.b32.cont [2/16] 0.0, 128
    %93 = vxpose.xlu0.b32.cont [3/16] 0.0, 128
    %94 = vxpose.xlu0.b32.cont [4/16] 0.0, 128
    %95 = vxpose.xlu0.b32.cont [5/16] 0.0, 128
    %96 = vxpose.xlu0.b32.cont [6/16] 0.0, 128
    %97 = vxpose.xlu0.b32.cont [7/16] 0.0, 128
    %98 = vxpose.xlu0.b32.cont [8/16] 0.0, 128
    %99 = vxpose.xlu0.b32.cont [9/16] 0.0, 128
    %100 = vxpose.xlu0.b32.cont [10/16] 0.0, 128
    %101 = vxpose.xlu0.b32.cont [11/16] 0.0, 128
    %102 = vxpose.xlu0.b32.cont [12/16] 0.0, 128
    %103 = vxpose.xlu0.b32.cont [13/16] 0.0, 128
    %104 = vxpose.xlu0.b32.cont [14/16] 0.0, 128
    %105 = vxpose.xlu0.b32.cont [15/16] 0.0, 128
    %106 = vxpose.xlu0.b32.end [16/16] 0.0, 128
    %v107 = vpop.trf.xlu0
    %v108 = vpop.trf.xlu0
    %v109 = vpop.trf.xlu0
    %v110 = vpop.trf.xlu0
    %v111 = vpop.trf.xlu0
    %v112 = vpop.trf.xlu0
    %v113 = vpop.trf.xlu0
    %v114 = vpop.trf.xlu0
    %v115 = vpop.trf.xlu0
    %v116 = vpop.trf.xlu0
    %v117 = vpop.trf.xlu0
    %v118 = vpop.trf.xlu0
    %v119 = vpop.trf.xlu0
    %v120 = vpop.trf.xlu0
    %v121 = vpop.trf.xlu0
    %v122 = vpop.trf.xlu0
    %123 = vxpose.xlu0.b32.start [1/16] %v80, 128
    %124 = vxpose.xlu0.b32.cont [2/16] 0.0, 128
    %125 = vxpose.xlu0.b32.cont [3/16] 0.0, 128
    %126 = vxpose.xlu0.b32.cont [4/16] 0.0, 128
    %127 = vxpose.xlu0.b32.cont [5/16] 0.0, 128
    %128 = vxpose.xlu0.b32.cont [6/16] 0.0, 128
    %129 = vxpose.xlu0.b32.cont [7/16] 0.0, 128
    %130 = vxpose.xlu0.b32.cont [8/16] 0.0, 128
    %131 = vxpose.xlu0.b32.cont [9/16] 0.0, 128
    %132 = vxpose.xlu0.b32.cont [10/16] 0.0, 128
    %133 = vxpose.xlu0.b32.cont [11/16] 0.0, 128
    %134 = vxpose.xlu0.b32.cont [12/16] 0.0, 128
    %135 = vxpose.xlu0.b32.cont [13/16] 0.0, 128
    %136 = vxpose.xlu0.b32.cont [14/16] 0.0, 128
    %137 = vxpose.xlu0.b32.cont [15/16] 0.0, 128
    %138 = vxpose.xlu0.b32.end [16/16] 0.0, 128
    %v139 = vpop.trf.xlu0
    %v140 = vpop.trf.xlu0
    %v141 = vpop.trf.xlu0
    %v142 = vpop.trf.xlu0
    %v143 = vpop.trf.xlu0
    %v144 = vpop.trf.xlu0
    %v145 = vpop.trf.xlu0
    %v146 = vpop.trf.xlu0
    %v147 = vpop.trf.xlu0
    %v148 = vpop.trf.xlu0
    %v149 = vpop.trf.xlu0
    %v150 = vpop.trf.xlu0
    %v151 = vpop.trf.xlu0
    %v152 = vpop.trf.xlu0
    %v153 = vpop.trf.xlu0
    %v154 = vpop.trf.xlu0
    %155 = vxpose.xlu0.b32.start [1/16] %v85, 128
    %156 = vxpose.xlu0.b32.cont [2/16] 0.0, 128
    %157 = vxpose.xlu0.b32.cont [3/16] 0.0, 128
    %158 = vxpose.xlu0.b32.cont [4/16] 0.0, 128
    %159 = vxpose.xlu0.b32.cont [5/16] 0.0, 128
    %160 = vxpose.xlu0.b32.cont [6/16] 0.0, 128
    %161 = vxpose.xlu0.b32.cont [7/16] 0.0, 128
    %162 = vxpose.xlu0.b32.cont [8/16] 0.0, 128
    %163 = vxpose.xlu0.b32.cont [9/16] 0.0, 128
    %164 = vxpose.xlu0.b32.cont [10/16] 0.0, 128
    %165 = vxpose.xlu0.b32.cont [11/16] 0.0, 128
    %166 = vxpose.xlu0.b32.cont [12/16] 0.0, 128
    %167 = vxpose.xlu0.b32.cont [13/16] 0.0, 128
    %168 = vxpose.xlu0.b32.cont [14/16] 0.0, 128
    %169 = vxpose.xlu0.b32.cont [15/16] 0.0, 128
    %170 = vxpose.xlu0.b32.end [16/16] 0.0, 128
    %v171 = vpop.trf.xlu0
    %v172 = vpop.trf.xlu0
    %v173 = vpop.trf.xlu0
    %v174 = vpop.trf.xlu0
    %v175 = vpop.trf.xlu0
    %v176 = vpop.trf.xlu0
    %v177 = vpop.trf.xlu0
    %v178 = vpop.trf.xlu0
    %v179 = vpop.trf.xlu0
    %v180 = vpop.trf.xlu0
    %v181 = vpop.trf.xlu0
    %v182 = vpop.trf.xlu0
    %v183 = vpop.trf.xlu0
    %v184 = vpop.trf.xlu0
    %v185 = vpop.trf.xlu0
    %v186 = vpop.trf.xlu0
    %187 = vxpose.xlu0.b32.start [1/16] %v88, 128
    %188 = vxpose.xlu0.b32.cont [2/16] 0.0, 128
    %189 = vxpose.xlu0.b32.cont [3/16] 0.0, 128
    %190 = vxpose.xlu0.b32.cont [4/16] 0.0, 128
    %191 = vxpose.xlu0.b32.cont [5/16] 0.0, 128
    %192 = vxpose.xlu0.b32.cont [6/16] 0.0, 128
    %193 = vxpose.xlu0.b32.cont [7/16] 0.0, 128
    %194 = vxpose.xlu0.b32.cont [8/16] 0.0, 128
    %195 = vxpose.xlu0.b32.cont [9/16] 0.0, 128
    %196 = vxpose.xlu0.b32.cont [10/16] 0.0, 128
    %197 = vxpose.xlu0.b32.cont [11/16] 0.0, 128
    %198 = vxpose.xlu0.b32.cont [12/16] 0.0, 128
    %199 = vxpose.xlu0.b32.cont [13/16] 0.0, 128
    %200 = vxpose.xlu0.b32.cont [14/16] 0.0, 128
    %201 = vxpose.xlu0.b32.cont [15/16] 0.0, 128
    %202 = vxpose.xlu0.b32.end [16/16] 0.0, 128
    %v203 = vpop.trf.xlu0
    %v204 = vpop.trf.xlu0
    %v205 = vpop.trf.xlu0
    %v206 = vpop.trf.xlu0
    %v207 = vpop.trf.xlu0
    %v208 = vpop.trf.xlu0
    %v209 = vpop.trf.xlu0
    %v210 = vpop.trf.xlu0
    %v211 = vpop.trf.xlu0
    %v212 = vpop.trf.xlu0
    %v213 = vpop.trf.xlu0
    %v214 = vpop.trf.xlu0
    %v215 = vpop.trf.xlu0
    %v216 = vpop.trf.xlu0
    %v217 = vpop.trf.xlu0
    %v218 = vpop.trf.xlu0
    %v219 = vpack.c.bf16 %v108, %v107
    %v220 = vpack.c.bf16 %v140, %v139
    %v221 = vpack.c.bf16 %v172, %v171
    %v222 = vpack.c.bf16 %v204, %v203
    %v223 = vld [vmem:[%s2] sm:$0xf]
    %v225 = vsel %vm31, %v219, 0
    %v228 = vsel %vm31, %v220, 0
    %v231 = vsel %vm31, %v221, 0
    %v234 = vsel %vm31, %v222, 0
    %v237 = vsel %vm38, %v223, 0
    %239 = vmatprep.subr.bf16.mxu0 0
    %240 = vmatpush1.bf16.msra.mxu0 0
    %241 = vmatprep.subr.bf16.mxu0 0
    %242 = vmatpush1.bf16.msra.mxu0 0
    %243 = vmatprep.subr.bf16.mxu0 0
    %244 = vmatpush1.bf16.msra.mxu0 0
    %245 = vmatprep.subr.bf16.mxu0 0
    %246 = vmatpush1.bf16.msra.mxu0 0
    %247 = vmatprep.subr.bf16.mxu0 0
    %248 = vmatpush1.bf16.msra.mxu0 0
    %249 = vmatprep.subr.bf16.mxu0 0
    %250 = vmatpush1.bf16.msra.mxu0 0
    %251 = vmatprep.subr.bf16.mxu0 0
    %252 = vmatpush1.bf16.msra.mxu0 0
    %253 = vmatprep.subr.bf16.mxu0 0
    %254 = vmatpush1.bf16.msra.mxu0 %v237
    %255 = vmatprep.subr.bf16.mxu0 0
    %256 = vmatpush2.bf16.msra.mxu0 0
    %257 = vmatprep.subr.bf16.mxu0 0
    %258 = vmatpush2.bf16.msra.mxu0 0
    %259 = vmatprep.subr.bf16.mxu0 0
    %260 = vmatpush2.bf16.msra.mxu0 0
    %261 = vmatprep.subr.bf16.mxu0 0
    %262 = vmatpush2.bf16.msra.mxu0 0
    %263 = vmatprep.subr.bf16.mxu0 0
    %264 = vmatpush2.bf16.msra.mxu0 0
    %265 = vmatprep.subr.bf16.mxu0 0
    %266 = vmatpush2.bf16.msra.mxu0 0
    %267 = vmatprep.subr.bf16.mxu0 0
    %268 = vmatpush2.bf16.msra.mxu0 0
    %269 = vmatprep.subr.bf16.mxu0 0
    %270 = vmatpush2.bf16.msra.mxu0 0
    %271 = vmatprep.mubr.bf16.mxu0 0
    %272 = vmatmul.mubr.bf16.gmra.mxu0 %v225
    %v273 = vpop.f32.mrf.mxu0
    %v274 = vadd.f32 0.0, %v273
    %v275 = vpop.f32.mrf.mxu0
    %v276 = vpop.f32.mrf.mxu0
    %v277 = vadd.f32 0.0, %v276
    %v278 = vpop.f32.mrf.mxu0
    %279 = vmatprep.mubr.bf16.mxu0 0
    %280 = vmatmul.mubr.bf16.gmra.mxu0 %v228
    %v281 = vpop.f32.mrf.mxu0
    %v282 = vadd.f32 0.0, %v281
    %v283 = vpop.f32.mrf.mxu0
    %v284 = vpop.f32.mrf.mxu0
    %v285 = vadd.f32 0.0, %v284
    %v286 = vpop.f32.mrf.mxu0
    %287 = vmatprep.mubr.bf16.mxu0 0
    %288 = vmatmul.mubr.bf16.gmra.mxu0 %v231
    %v289 = vpop.f32.mrf.mxu0
    %v290 = vadd.f32 0.0, %v289
    %v291 = vpop.f32.mrf.mxu0
    %v292 = vpop.f32.mrf.mxu0
    %v293 = vadd.f32 0.0, %v292
    %v294 = vpop.f32.mrf.mxu0
    %295 = vmatprep.mubr.bf16.mxu0 0
    %296 = vmatmul.mubr.bf16.gmra.mxu0 %v234
    %v297 = vpop.f32.mrf.mxu0
    %v298 = vadd.f32 0.0, %v297
    %v299 = vpop.f32.mrf.mxu0
    %v300 = vpop.f32.mrf.mxu0
    %v301 = vadd.f32 0.0, %v300
    %v302 = vpop.f32.mrf.mxu0
    %303 = vdwg.mxu0
    %vm304 = vcmask 130048
    %305 = vst.msk [vmem:[#allocation2] sm:$0xff] %vm304, %v274
    %306 = vst.msk [vmem:[#allocation2 + $0x8] sm:$0xff] %vm304, %v277
    %307 = vst.msk [vmem:[#allocation2 + $0x10] sm:$0xff] %vm304, %v282
    %308 = vst.msk [vmem:[#allocation2 + $0x18] sm:$0xff] %vm304, %v285
    %309 = vst.msk [vmem:[#allocation2 + $0x20] sm:$0xff] %vm304, %v290
    %310 = vst.msk [vmem:[#allocation2 + $0x28] sm:$0xff] %vm304, %v293
    %311 = vst.msk [vmem:[#allocation2 + $0x30] sm:$0xff] %vm304, %v298
    %312 = vst.msk [vmem:[#allocation2 + $0x38] sm:$0xff] %vm304, %v301
    // Predicated region
    $region14: #{qtseg_forward.3} parent=1 // pred_check
      _
    $region15: #{qtseg_forward.3} parent=1 // pred_check_branch
      %314 = sbr.rel (0) target = $region17
    $region16: #{qtseg_forward.3} parent=1 // pred_region
      %s316 = ssub.s32 1024, 1024
      %317 = vsyncadd [#allocation3], %s316
      %s318 = sshll.u32 [#allocation2], 4
      %s319 = int_to_ptr.vmem [resolvable:$true] %s318
      %324 = dma.vmem_to_hbm [thread:$0]  %s319, 1024, %s3, [#allocation3], 128, 128, 8
    $region17: #{qtseg_forward.3} parent=1 // pred_fallthru
      _
    // Predicated region
    $region18: #{qtseg_forward.3} parent=1 // pred_check
      _
    $region19: #{qtseg_forward.3} parent=1 // pred_check_branch
      %326 = sbr.rel (0) target = $region21
    $region20: #{qtseg_forward.3} parent=1 // pred_region
      %327 = dma.done [#allocation3], 1024
    $region21: #{qtseg_forward.3} parent=1 // pred_fallthru
      _
    %328 = vsyncpa [#allocation3], 1

// kernel: qtseg_forward.2
$region0: #{qtseg_forward.2}
  #allocation0 [shape = 'u32[]', space=smem, size = 0x4, offset = 0x4, fixed_abs, tag = 'smem constant byte address 0x4 - core index']
  #allocation1 [shape = 'u32[144,128]{1,0:T(1,128)}', space=vmem, size = 0x12000, scoped, tag = 'internal scratch']
  %s0 = inlined_call_operand.vmem [shape: bf16[2,64,64], index: 0, kind: input, shape index: {}]
  %s1 = inlined_call_operand.vmem [shape: bf16[64,128], index: 1, kind: input, shape index: {}]
  %s2 = inlined_call_operand.vmem [shape: f32[1,128], index: 2, kind: input, shape index: {}]
  %s3 = inlined_call_operand.vmem [shape: bf16[128,128], index: 3, kind: input, shape index: {}]
  %s4 = inlined_call_operand.vmem [shape: f32[1,128], index: 4, kind: input, shape index: {}]
  %s5 = inlined_call_operand.vmem [shape: bf16[128,128], index: 5, kind: input, shape index: {}]
  %s6 = inlined_call_operand.vmem [shape: f32[1,128], index: 6, kind: input, shape index: {}]
  %s7 = inlined_call_operand.vmem [shape: bf16[8,32], index: 7, kind: input, shape index: {}]
  %s8 = inlined_call_operand.vmem [shape: f32[8,1], index: 8, kind: input, shape index: {}]
  %s9 = inlined_call_operand.vmem [shape: f32[2,32,64], index: 9, kind: output, shape index: {0}]
  %s10 = inlined_call_operand.vmem [shape: bf16[2,2,64], index: 10, kind: output, shape index: {1}]
  %11 = xla_tuple %s9, %s10
  %s12 = sld [smem:[#allocation0]]
  $region77: #{qtseg_forward.2} parent=0
    _
  %s14 = ssub.s32 1, %s12
  %s15 = scalar_select 0, %s14, %s12
  loop: start=0, step=1, limit=4
  $region2: #{qtseg_forward.2} parent=0 // loop_pre_header
    _
  $region3: #{qtseg_forward.2} parent=0 // loop_header
    %s17 = sphi 0, %s21
    %p18 = scmp.ge.s32.totalorder %s17, 4
    %s24 = sphi 0, %s36
    %s25 = sphi 0, %s32
    %s26 = sphi 0, %s24
    %s27 = sphi 0, %s25
    %s28 = sphi 0, %s26
    %s29 = sphi 0, %s27
    %s41 = sphi 0, %s43
    %s44 = sphi 0, %s41
    %s45 = sphi 0, %s44
    %s61 = sphi 0, %s45
    %s65 = sphi 0, %s65
    %s67 = sphi 0, %s65
    %s68 = sphi 0, %s67
    %s82 = sphi 0, %s68
    %s86 = sphi 0, %s86
    %s88 = sphi 0, %s86
    %s89 = sphi 0, %s88
    %s103 = sphi 0, %s89
    %s107 = sphi 0, %s107
    %s109 = sphi 0, %s107
    %s110 = sphi 0, %s109
    %s124 = sphi 0, %s110
    %s128 = sphi 0, %s128
    %s130 = sphi 0, %s128
    %s131 = sphi 0, %s130
    %s145 = sphi 0, %s131
    %s149 = sphi 0, %s149
    %s151 = sphi 0, %s149
    %s152 = sphi 0, %s151
    %s166 = sphi 0, %s152
    %s170 = sphi 0, %s170
    %s172 = sphi 0, %s170
    %s173 = sphi 0, %s172
    %s187 = sphi 0, %s173
    %s191 = sphi 0, %s191
    %s193 = sphi 0, %s191
    %s194 = sphi 0, %s193
    %s208 = sphi 0, %s194
    %s212 = sphi 0, %s212
    %s214 = sphi 0, %s212
    %s215 = sphi 0, %s214
    %s229 = sphi 0, %s215
    %s237 = sphi 0, %s239
    %s240 = sphi 0, %s237
    %s241 = sphi 0, %s240
    %s257 = sphi 0, %s241
    %s265 = sphi 0, %s267
    %s268 = sphi 0, %s265
    %s269 = sphi 0, %s268
    %s285 = sphi 0, %s269
  $region4: #{qtseg_forward.2} parent=0 // loop_header_branch
    %20 = sbr.rel (%p18) target = $region8
  $region5: #{qtseg_forward.2} parent=0 // loop_body
    %s22 = ssub.s32 %s17, 1
    %s23 = ssub.s32 %s17, 2
    %s30 = sadd.s32 1, %s25
    %p31 = scmp.ge.s32.totalorder %s30, 1
    %s32 = scalar_select %p31, 0, %s30
    %s33 = sadd.s32 1, %s24
    %s34 = scalar_select %p31, %s33, %s24
    %p35 = scmp.ge.s32.totalorder %s34, 2
    %s36 = scalar_select %p35, 0, %s34
    %s37 = ssub.s32 %s24, %s36
    %s38 = ssub.s32 %s25, %s32
    %s39 = sor.u32 %s37, %s38
    %p40 = scmp.eq.s32.totalorder %s39, 0
    %s42 = sadd.s32 %s41, 1
    %s43 = scalar_select %p40, %s41, %s42
    %p46 = pneg %p40
    %p47 = scmp.eq.s32.totalorder %s17, 1
    %p48 = por %p46, %p47
    %p49 = scmp.ne.s32.totalorder %s41, %s44
    %p50 = scmp.eq.s32.totalorder %s17, 0
    %p51 = por %p49, %p50
    %p52 = scmp.ne.s32.totalorder %s41, %s44
    %p53 = scmp.eq.s32.totalorder %s22, 1
    %p54 = por %p52, %p53
    %p55 = scmp.ne.s32.totalorder %s44, %s45
    %p56 = scmp.eq.s32.totalorder %s22, 0
    %p57 = por %p55, %p56
    %p58 = scmp.ne.s32.totalorder %s44, %s45
    %p59 = scmp.eq.s32.totalorder %s23, 1
    %p60 = por %p58, %p59
    %p62 = scmp.ne.s32.totalorder %s45, %s61
    %p63 = scmp.eq.s32.totalorder %s23, 0
    %p64 = por %p62, %p63
    %s66 = sadd.s32 %s65, 1
    %p69 = scmp.eq.s32.totalorder %s17, 1
    %p70 = scmp.ne.s32.totalorder %s65, %s67
    %p71 = scmp.eq.s32.totalorder %s17, 0
    %p72 = por %p70, %p71
    %p73 = scmp.ne.s32.totalorder %s65, %s67
    %p74 = scmp.eq.s32.totalorder %s22, 1
    %p75 = por %p73, %p74
    %p76 = scmp.ne.s32.totalorder %s67, %s68
    %p77 = scmp.eq.s32.totalorder %s22, 0
    %p78 = por %p76, %p77
    %p79 = scmp.ne.s32.totalorder %s67, %s68
    %p80 = scmp.eq.s32.totalorder %s23, 1
    %p81 = por %p79, %p80
    %p83 = scmp.ne.s32.totalorder %s68, %s82
    %p84 = scmp.eq.s32.totalorder %s23, 0
    %p85 = por %p83, %p84
    %s87 = sadd.s32 %s86, 1
    %p90 = scmp.eq.s32.totalorder %s17, 1
    %p91 = scmp.ne.s32.totalorder %s86, %s88
    %p92 = scmp.eq.s32.totalorder %s17, 0
    %p93 = por %p91, %p92
    %p94 = scmp.ne.s32.totalorder %s86, %s88
    %p95 = scmp.eq.s32.totalorder %s22, 1
    %p96 = por %p94, %p95
    %p97 = scmp.ne.s32.totalorder %s88, %s89
    %p98 = scmp.eq.s32.totalorder %s22, 0
    %p99 = por %p97, %p98
    %p100 = scmp.ne.s32.totalorder %s88, %s89
    %p101 = scmp.eq.s32.totalorder %s23, 1
    %p102 = por %p100, %p101
    %p104 = scmp.ne.s32.totalorder %s89, %s103
    %p105 = scmp.eq.s32.totalorder %s23, 0
    %p106 = por %p104, %p105
    %s108 = sadd.s32 %s107, 1
    %p111 = scmp.eq.s32.totalorder %s17, 1
    %p112 = scmp.ne.s32.totalorder %s107, %s109
    %p113 = scmp.eq.s32.totalorder %s17, 0
    %p114 = por %p112, %p113
    %p115 = scmp.ne.s32.totalorder %s107, %s109
    %p116 = scmp.eq.s32.totalorder %s22, 1
    %p117 = por %p115, %p116
    %p118 = scmp.ne.s32.totalorder %s109, %s110
    %p119 = scmp.eq.s32.totalorder %s22, 0
    %p120 = por %p118, %p119
    %p121 = scmp.ne.s32.totalorder %s109, %s110
    %p122 = scmp.eq.s32.totalorder %s23, 1
    %p123 = por %p121, %p122
    %p125 = scmp.ne.s32.totalorder %s110, %s124
    %p126 = scmp.eq.s32.totalorder %s23, 0
    %p127 = por %p125, %p126
    %s129 = sadd.s32 %s128, 1
    %p132 = scmp.eq.s32.totalorder %s17, 1
    %p133 = scmp.ne.s32.totalorder %s128, %s130
    %p134 = scmp.eq.s32.totalorder %s17, 0
    %p135 = por %p133, %p134
    %p136 = scmp.ne.s32.totalorder %s128, %s130
    %p137 = scmp.eq.s32.totalorder %s22, 1
    %p138 = por %p136, %p137
    %p139 = scmp.ne.s32.totalorder %s130, %s131
    %p140 = scmp.eq.s32.totalorder %s22, 0
    %p141 = por %p139, %p140
    %p142 = scmp.ne.s32.totalorder %s130, %s131
    %p143 = scmp.eq.s32.totalorder %s23, 1
    %p144 = por %p142, %p143
    %p146 = scmp.ne.s32.totalorder %s131, %s145
    %p147 = scmp.eq.s32.totalorder %s23, 0
    %p148 = por %p146, %p147
    %s150 = sadd.s32 %s149, 1
    %p153 = scmp.eq.s32.totalorder %s17, 1
    %p154 = scmp.ne.s32.totalorder %s149, %s151
    %p155 = scmp.eq.s32.totalorder %s17, 0
    %p156 = por %p154, %p155
    %p157 = scmp.ne.s32.totalorder %s149, %s151
    %p158 = scmp.eq.s32.totalorder %s22, 1
    %p159 = por %p157, %p158
    %p160 = scmp.ne.s32.totalorder %s151, %s152
    %p161 = scmp.eq.s32.totalorder %s22, 0
    %p162 = por %p160, %p161
    %p163 = scmp.ne.s32.totalorder %s151, %s152
    %p164 = scmp.eq.s32.totalorder %s23, 1
    %p165 = por %p163, %p164
    %p167 = scmp.ne.s32.totalorder %s152, %s166
    %p168 = scmp.eq.s32.totalorder %s23, 0
    %p169 = por %p167, %p168
    %s171 = sadd.s32 %s170, 1
    %p174 = scmp.eq.s32.totalorder %s17, 1
    %p175 = scmp.ne.s32.totalorder %s170, %s172
    %p176 = scmp.eq.s32.totalorder %s17, 0
    %p177 = por %p175, %p176
    %p178 = scmp.ne.s32.totalorder %s170, %s172
    %p179 = scmp.eq.s32.totalorder %s22, 1
    %p180 = por %p178, %p179
    %p181 = scmp.ne.s32.totalorder %s172, %s173
    %p182 = scmp.eq.s32.totalorder %s22, 0
    %p183 = por %p181, %p182
    %p184 = scmp.ne.s32.totalorder %s172, %s173
    %p185 = scmp.eq.s32.totalorder %s23, 1
    %p186 = por %p184, %p185
    %p188 = scmp.ne.s32.totalorder %s173, %s187
    %p189 = scmp.eq.s32.totalorder %s23, 0
    %p190 = por %p188, %p189
    %s192 = sadd.s32 %s191, 1
    %p195 = scmp.eq.s32.totalorder %s17, 1
    %p196 = scmp.ne.s32.totalorder %s191, %s193
    %p197 = scmp.eq.s32.totalorder %s17, 0
    %p198 = por %p196, %p197
    %p199 = scmp.ne.s32.totalorder %s191, %s193
    %p200 = scmp.eq.s32.totalorder %s22, 1
    %p201 = por %p199, %p200
    %p202 = scmp.ne.s32.totalorder %s193, %s194
    %p203 = scmp.eq.s32.totalorder %s22, 0
    %p204 = por %p202, %p203
    %p205 = scmp.ne.s32.totalorder %s193, %s194
    %p206 = scmp.eq.s32.totalorder %s23, 1
    %p207 = por %p205, %p206
    %p209 = scmp.ne.s32.totalorder %s194, %s208
    %p210 = scmp.eq.s32.totalorder %s23, 0
    %p211 = por %p209, %p210
    %s213 = sadd.s32 %s212, 1
    %p216 = scmp.eq.s32.totalorder %s17, 1
    %p217 = scmp.ne.s32.totalorder %s212, %s214
    %p218 = scmp.eq.s32.totalorder %s17, 0
    %p219 = por %p217, %p218
    %p220 = scmp.ne.s32.totalorder %s212, %s214
    %p221 = scmp.eq.s32.totalorder %s22, 1
    %p222 = por %p220, %p221
    %p223 = scmp.ne.s32.totalorder %s214, %s215
    %p224 = scmp.eq.s32.totalorder %s22, 0
    %p225 = por %p223, %p224
    %p226 = scmp.ne.s32.totalorder %s214, %s215
    %p227 = scmp.eq.s32.totalorder %s23, 1
    %p228 = por %p226, %p227
    %p230 = scmp.ne.s32.totalorder %s215, %s229
    %p231 = scmp.eq.s32.totalorder %s23, 0
    %p232 = por %p230, %p231
    %s233 = ssub.s32 %s24, %s36
    %s234 = ssub.s32 %s25, %s32
    %s235 = sor.u32 %s233, %s234
    %p236 = scmp.eq.s32.totalorder %s235, 0
    %s238 = sadd.s32 %s237, 1
    %s239 = scalar_select %p236, %s237, %s238
    %p242 = pneg %p236
    %p243 = scmp.eq.s32.totalorder %s17, 1
    %p244 = por %p242, %p243
    %p245 = scmp.ne.s32.totalorder %s237, %s240
    %p246 = scmp.eq.s32.totalorder %s17, 0
    %p247 = por %p245, %p246
    %p248 = scmp.ne.s32.totalorder %s237, %s240
    %p249 = scmp.eq.s32.totalorder %s22, 1
    %p250 = por %p248, %p249
    %p251 = scmp.ne.s32.totalorder %s240, %s241
    %p252 = scmp.eq.s32.totalorder %s22, 0
    %p253 = por %p251, %p252
    %p254 = scmp.ne.s32.totalorder %s240, %s241
    %p255 = scmp.eq.s32.totalorder %s23, 1
    %p256 = por %p254, %p255
    %p258 = scmp.ne.s32.totalorder %s241, %s257
    %p259 = scmp.eq.s32.totalorder %s23, 0
    %p260 = por %p258, %p259
    %s261 = ssub.s32 %s24, %s36
    %s262 = ssub.s32 %s25, %s32
    %s263 = sor.u32 %s261, %s262
    %p264 = scmp.eq.s32.totalorder %s263, 0
    %s266 = sadd.s32 %s265, 1
    %s267 = scalar_select %p264, %s265, %s266
    %p270 = pneg %p264
    %p271 = scmp.eq.s32.totalorder %s17, 1
    %p272 = por %p270, %p271
    %p273 = scmp.ne.s32.totalorder %s265, %s268
    %p274 = scmp.eq.s32.totalorder %s17, 0
    %p275 = por %p273, %p274
    %p276 = scmp.ne.s32.totalorder %s265, %s268
    %p277 = scmp.eq.s32.totalorder %s22, 1
    %p278 = por %p276, %p277
    %p279 = scmp.ne.s32.totalorder %s268, %s269
    %p280 = scmp.eq.s32.totalorder %s22, 0
    %p281 = por %p279, %p280
    %p282 = scmp.ne.s32.totalorder %s268, %s269
    %p283 = scmp.eq.s32.totalorder %s23, 1
    %p284 = por %p282, %p283
    %p286 = scmp.ne.s32.totalorder %s269, %s285
    %p287 = scmp.eq.s32.totalorder %s23, 0
    %p288 = por %p286, %p287
    %p289 = scmp.le.s32.totalorder 1, %s17
    %p290 = scmp.lt.s32.totalorder %s17, 3
    %p291 = pnand %p289, %p290
    %p292 = pneg %p291
    // Predicated region
    $region9: #{qtseg_forward.2} parent=5 // pred_check
      _
    $region10: #{qtseg_forward.2} parent=5 // pred_check_branch
      %294 = sbr.rel (%p291) target = $region12
    $region11: #{qtseg_forward.2} parent=5 // pred_region
      %s295 = ssub.s32 %s17, 1
      // Predicated region
      $region13: #{qtseg_forward.2} parent=11 // pred_check
        %p296 = pneg %p78
      $region14: #{qtseg_forward.2} parent=11 // pred_check_branch
        %298 = sbr.rel (%p296) target = $region16
      $region15: #{qtseg_forward.2} parent=11 // pred_region
        _
      $region16: #{qtseg_forward.2} parent=11 // pred_fallthru
        _
      // Predicated region
      $region17: #{qtseg_forward.2} parent=11 // pred_check
        %p299 = pneg %p99
      $region18: #{qtseg_forward.2} parent=11 // pred_check_branch
        %301 = sbr.rel (%p299) target = $region20
      $region19: #{qtseg_forward.2} parent=11 // pred_region
        _
      $region20: #{qtseg_forward.2} parent=11 // pred_fallthru
        _
      // Predicated region
      $region21: #{qtseg_forward.2} parent=11 // pred_check
        %p302 = pneg %p120
      $region22: #{qtseg_forward.2} parent=11 // pred_check_branch
        %304 = sbr.rel (%p302) target = $region24
      $region23: #{qtseg_forward.2} parent=11 // pred_region
        _
      $region24: #{qtseg_forward.2} parent=11 // pred_fallthru
        _
      // Predicated region
      $region25: #{qtseg_forward.2} parent=11 // pred_check
        %p305 = pneg %p141
      $region26: #{qtseg_forward.2} parent=11 // pred_check_branch
        %307 = sbr.rel (%p305) target = $region28
      $region27: #{qtseg_forward.2} parent=11 // pred_region
        _
      $region28: #{qtseg_forward.2} parent=11 // pred_fallthru
        _
      // Predicated region
      $region29: #{qtseg_forward.2} parent=11 // pred_check
        %p308 = pneg %p162
      $region30: #{qtseg_forward.2} parent=11 // pred_check_branch
        %310 = sbr.rel (%p308) target = $region32
      $region31: #{qtseg_forward.2} parent=11 // pred_region
        _
      $region32: #{qtseg_forward.2} parent=11 // pred_fallthru
        _
      // Predicated region
      $region33: #{qtseg_forward.2} parent=11 // pred_check
        %p311 = pneg %p183
      $region34: #{qtseg_forward.2} parent=11 // pred_check_branch
        %313 = sbr.rel (%p311) target = $region36
      $region35: #{qtseg_forward.2} parent=11 // pred_region
        _
      $region36: #{qtseg_forward.2} parent=11 // pred_fallthru
        _
      // Predicated region
      $region37: #{qtseg_forward.2} parent=11 // pred_check
        %p314 = pneg %p204
      $region38: #{qtseg_forward.2} parent=11 // pred_check_branch
        %316 = sbr.rel (%p314) target = $region40
      $region39: #{qtseg_forward.2} parent=11 // pred_region
        _
      $region40: #{qtseg_forward.2} parent=11 // pred_fallthru
        _
      // Predicated region
      $region41: #{qtseg_forward.2} parent=11 // pred_check
        %p317 = pneg %p225
      $region42: #{qtseg_forward.2} parent=11 // pred_check_branch
        %319 = sbr.rel (%p317) target = $region44
      $region43: #{qtseg_forward.2} parent=11 // pred_region
        _
      $region44: #{qtseg_forward.2} parent=11 // pred_fallthru
        _
    $region12: #{qtseg_forward.2} parent=5 // pred_fallthru
      _
    %p320 = scmp.lt.s32.totalorder %s17, 2
    // Predicated region
    $region45: #{qtseg_forward.2} parent=5 // pred_check
      %p321 = pneg %p320
    $region46: #{qtseg_forward.2} parent=5 // pred_check_branch
      %323 = sbr.rel (%p321) target = $region48
    $region47: #{qtseg_forward.2} parent=5 // pred_region
      // Predicated region
      $region49: #{qtseg_forward.2} parent=47 // pred_check
        %p324 = pneg %p51
      $region50: #{qtseg_forward.2} parent=47 // pred_check_branch
        %326 = sbr.rel (%p324) target = $region52
      $region51: #{qtseg_forward.2} parent=47 // pred_region
        %s327 = smul.u32 8, %s25
        %p328 = scmp.lt.s32.totalorder %s24, 1
        %s329 = scalar_select %p328, %s24, 1
        %p330 = scmp.lt.s32.totalorder %s327, 7
        %s331 = scalar_select %p330, %s327, 7
        %s332 = smul.addr %s329, 8
        %s333 = sadd.s32 %s331, %s332
        %s334 = smul.addr %s333, 4
        %s335 = scalar_lea.vmem %s0, %s334
        %s336 = smul.u32 8, %s25
      $region52: #{qtseg_forward.2} parent=47 // pred_fallthru
        _
    $region48: #{qtseg_forward.2} parent=5 // pred_fallthru
      _
    %p337 = scmp.le.s32.totalorder 1, %s17
    %p338 = scmp.lt.s32.totalorder %s17, 3
    %p339 = pnand %p337, %p338
    %p340 = pneg %p339
    // Predicated region
    $region53: #{qtseg_forward.2} parent=5 // pred_check
      _
    $region54: #{qtseg_forward.2} parent=5 // pred_check_branch
      %342 = sbr.rel (%p339) target = $region56
    $region55: #{qtseg_forward.2} parent=5 // pred_region
      %s343 = ssub.s32 %s17, 1
      %s344 = smul.u32 8, %s27
      %p345 = scmp.lt.s32.totalorder %s26, 1
      %s346 = scalar_select %p345, %s26, 1
      %p347 = scmp.lt.s32.totalorder %s344, 7
      %s348 = scalar_select %p347, %s344, 7
      %s349 = smul.addr %s346, 8
      %s350 = sadd.s32 %s348, %s349
      %s351 = smul.addr %s350, 4
      %s352 = scalar_lea.vmem %s0, %s351
      %p353 = pneg %p57
      %p354 = pneg %p54
      %p355 = pneg %p78
      %p356 = pneg %p75
      %p357 = pneg %p99
      %p358 = pneg %p96
      %p359 = pneg %p120
      %p360 = pneg %p117
      %p361 = pneg %p141
      %p362 = pneg %p138
      %p363 = pneg %p162
      %p364 = pneg %p159
      %p365 = pneg %p183
      %p366 = pneg %p180
      %p367 = pneg %p204
      %p368 = pneg %p201
      %p369 = pneg %p225
      %p370 = pneg %p222
      %p371 = pneg %p253
      %p372 = pneg %p250
      %p373 = scmp.lt.s32.totalorder %s26, 1
      %s374 = scalar_select %p373, %s26, 1
      %p375 = scmp.lt.s32.totalorder %s27, 0
      %s376 = scalar_select %p375, %s27, 0
      %s377 = smul.addr %s374, 4
      %s378 = sadd.s32 %s376, %s377
      %s379 = smul.addr %s378, 8
      %s380 = scalar_lea.vmem %s9, %s379
      %p381 = pneg %p281
      %p382 = pneg %p278
      %p383 = scmp.lt.s32.totalorder %s26, 1
      %s384 = scalar_select %p383, %s26, 1
      %p385 = scmp.lt.s32.totalorder %s27, 0
      %s386 = scalar_select %p385, %s27, 0
      %s387 = sadd.s32 %s386, %s384
      %s388 = scalar_lea.vmem %s10, %s387
      %s389 = smul.u32 8, %s27
      %p390 = scmp.lt.s32.totalorder %s26, 1
      %s391 = scalar_select %p390, %s26, 1
      %p392 = scmp.lt.s32.totalorder %s389, 7
      %s393 = scalar_select %p392, %s389, 7
      %s394 = smul.addr %s391, 8
      %s395 = sadd.s32 %s393, %s394
      %s396 = smul.addr %s395, 4
      %s397 = scalar_lea.vmem %s0, %s396
      %s398 = smul.u32 8, %s27
      %p399 = scmp.lt.s32.totalorder %s26, 1
      %s400 = scalar_select %p399, %s26, 1
      %p401 = scmp.lt.s32.totalorder %s27, 0
      %s402 = scalar_select %p401, %s27, 0
      %s403 = smul.addr %s400, 4
      %s404 = sadd.s32 %s402, %s403
      %s405 = smul.addr %s404, 8
      %s406 = scalar_lea.vmem %s9, %s405
      %p407 = scmp.lt.s32.totalorder %s26, 1
      %s408 = scalar_select %p407, %s26, 1
      %p409 = scmp.lt.s32.totalorder %s27, 0
      %s410 = scalar_select %p409, %s27, 0
      %s411 = sadd.s32 %s410, %s408
      %s412 = scalar_lea.vmem %s10, %s411
      %v414 = vld [vmem:[%s397] sm:$0xf]
      %v415 = vld [vmem:[%s397 + $0x4] sm:$0xf]
      %v416 = vld [vmem:[%s397 + $0x8] sm:$0xf]
      %v417 = vld [vmem:[%s397 + $0xc] sm:$0xf]
      %v418 = vld [vmem:[%s397 + $0x10] sm:$0xf]
      %v419 = vld [vmem:[%s397 + $0x14] sm:$0xf]
      %v420 = vld [vmem:[%s397 + $0x18] sm:$0xf]
      %v421 = vld [vmem:[%s397 + $0x1c] sm:$0xf]
      %v422 = vld [vmem:[%s1] sm:$0xf]
      %v423 = vld [vmem:[%s1 + $0x4] sm:$0xf]
      %v424 = vld [vmem:[%s1 + $0x8] sm:$0xf]
      %v425 = vld [vmem:[%s1 + $0xc] sm:$0xf]
      %v426 = vld [vmem:[%s1 + $0x10] sm:$0xf]
      %v427 = vld [vmem:[%s1 + $0x14] sm:$0xf]
      %v428 = vld [vmem:[%s1 + $0x18] sm:$0xf]
      %v429 = vld [vmem:[%s1 + $0x1c] sm:$0xf]
      %v430 = vld [vmem:[%s2] sm:$0x1]
      %v432 = vlaneseq
      %v433 = vshrl.u32 %v432, 7
      %v434 = vsub.s32 0, %v433
      %v435 = vrot.slane %v430, %v434
      %v445 = vunpack.c.l.b16 %v414
      %v446 = vunpack.c.l.b16 %v415
      %v447 = vunpack.c.l.b16 %v416
      %v448 = vunpack.c.l.b16 %v417
      %v449 = vunpack.c.l.b16 %v418
      %v450 = vunpack.c.l.b16 %v419
      %v451 = vunpack.c.l.b16 %v420
      %v452 = vunpack.c.l.b16 %v421
      %v453 = vpack.c.b16 %v446, %v445
      %v454 = vpack.c.b16 %v448, %v447
      %v455 = vpack.c.b16 %v450, %v449
      %v456 = vpack.c.b16 %v452, %v451
      %v465 = vunpack.c.l.b16 %v422
      %v466 = vunpack.c.l.b16 %v423
      %v467 = vunpack.c.l.b16 %v424
      %v468 = vunpack.c.l.b16 %v425
      %v469 = vunpack.c.l.b16 %v426
      %v470 = vunpack.c.l.b16 %v427
      %v471 = vunpack.c.l.b16 %v428
      %v472 = vunpack.c.l.b16 %v429
      %v473 = vpack.c.b16 %v466, %v465
      %v474 = vpack.c.b16 %v468, %v467
      %v475 = vpack.c.b16 %v470, %v469
      %v476 = vpack.c.b16 %v472, %v471
      %vm481 = vcmask 523264
      %v483 = vsel %vm481, %v453, 0
      %v486 = vsel %vm481, %v454, 0
      %v489 = vsel %vm481, %v455, 0
      %v492 = vsel %vm481, %v456, 0
      %494 = vmatprep.subr.bf16.mxu0 0
      %495 = vmatpush1.bf16.msra.mxu0 0
      %496 = vmatprep.subr.bf16.mxu0 0
      %497 = vmatpush1.bf16.msra.mxu0 0
      %498 = vmatprep.subr.bf16.mxu0 0
      %499 = vmatpush1.bf16.msra.mxu0 0
      %500 = vmatprep.subr.bf16.mxu0 0
      %501 = vmatpush1.bf16.msra.mxu0 0
      %502 = vmatprep.subr.bf16.mxu0 0
      %503 = vmatpush1.bf16.msra.mxu0 %v476
      %504 = vmatprep.subr.bf16.mxu0 0
      %505 = vmatpush1.bf16.msra.mxu0 %v475
      %506 = vmatprep.subr.bf16.mxu0 0
      %507 = vmatpush1.bf16.msra.mxu0 %v474
      %508 = vmatprep.subr.bf16.mxu0 0
      %509 = vmatpush1.bf16.msra.mxu0 %v473
      %510 = vmatprep.subr.bf16.mxu0 0
      %511 = vmatpush2.bf16.msra.mxu0 0
      %512 = vmatprep.subr.bf16.mxu0 0
      %513 = vmatpush2.bf16.msra.mxu0 0
      %514 = vmatprep.subr.bf16.mxu0 0
      %515 = vmatpush2.bf16.msra.mxu0 0
      %516 = vmatprep.subr.bf16.mxu0 0
      %517 = vmatpush2.bf16.msra.mxu0 0
      %518 = vmatprep.subr.bf16.mxu0 0
      %519 = vmatpush2.bf16.msra.mxu0 0
      %520 = vmatprep.subr.bf16.mxu0 0
      %521 = vmatpush2.bf16.msra.mxu0 0
      %522 = vmatprep.subr.bf16.mxu0 0
      %523 = vmatpush2.bf16.msra.mxu0 0
      %524 = vmatprep.subr.bf16.mxu0 0
      %525 = vmatpush2.bf16.msra.mxu0 0
      %526 = vmatprep.mubr.bf16.mxu0 0
      %527 = vmatmul.mubr.bf16.gmra.mxu0 %v483
      %v528 = vpop.f32.mrf.mxu0
      %v529 = vadd.f32 %v435, %v528
      %v530 = vpop.f32.mrf.mxu0
      %v531 = vpop.f32.mrf.mxu0
      %v532 = vadd.f32 %v435, %v531
      %v533 = vpop.f32.mrf.mxu0
      %534 = vmatprep.mubr.bf16.mxu0 0
      %535 = vmatmul.mubr.bf16.gmra.mxu0 %v486
      %v536 = vpop.f32.mrf.mxu0
      %v537 = vadd.f32 %v435, %v536
      %v538 = vpop.f32.mrf.mxu0
      %v539 = vpop.f32.mrf.mxu0
      %v540 = vadd.f32 %v435, %v539
      %v541 = vpop.f32.mrf.mxu0
      %542 = vmatprep.mubr.bf16.mxu0 0
      %543 = vmatmul.mubr.bf16.gmra.mxu0 %v489
      %v544 = vpop.f32.mrf.mxu0
      %v545 = vadd.f32 %v435, %v544
      %v546 = vpop.f32.mrf.mxu0
      %v547 = vpop.f32.mrf.mxu0
      %v548 = vadd.f32 %v435, %v547
      %v549 = vpop.f32.mrf.mxu0
      %550 = vmatprep.mubr.bf16.mxu0 0
      %551 = vmatmul.mubr.bf16.gmra.mxu0 %v492
      %v552 = vpop.f32.mrf.mxu0
      %v553 = vadd.f32 %v435, %v552
      %v554 = vpop.f32.mrf.mxu0
      %v555 = vpop.f32.mrf.mxu0
      %v556 = vadd.f32 %v435, %v555
      %v557 = vpop.f32.mrf.mxu0
      %558 = vdwg.mxu0
      %v559 = vmax.f32 %v529, 0.0
      %v560 = vmax.f32 %v532, 0.0
      %v561 = vmax.f32 %v537, 0.0
      %v562 = vmax.f32 %v540, 0.0
      %v563 = vmax.f32 %v545, 0.0
      %v564 = vmax.f32 %v548, 0.0
      %v565 = vmax.f32 %v553, 0.0
      %v566 = vmax.f32 %v556, 0.0
      %v567 = vpack.c.bf16 %v560, %v559
      %v568 = vpack.c.bf16 %v562, %v561
      %v569 = vpack.c.bf16 %v564, %v563
      %v570 = vpack.c.bf16 %v566, %v565
      %v571 = vld [vmem:[%s3] sm:$0xf]
      %v572 = vld [vmem:[%s3 + $0x4] sm:$0xf]
      %v573 = vld [vmem:[%s3 + $0x8] sm:$0xf]
      %v574 = vld [vmem:[%s3 + $0xc] sm:$0xf]
      %v575 = vld [vmem:[%s3 + $0x10] sm:$0xf]
      %v576 = vld [vmem:[%s3 + $0x14] sm:$0xf]
      %v577 = vld [vmem:[%s3 + $0x18] sm:$0xf]
      %v578 = vld [vmem:[%s3 + $0x1c] sm:$0xf]
      %v579 = vld [vmem:[%s3 + $0x20] sm:$0xf]
      %v580 = vld [vmem:[%s3 + $0x24] sm:$0xf]
      %v581 = vld [vmem:[%s3 + $0x28] sm:$0xf]
      %v582 = vld [vmem:[%s3 + $0x2c] sm:$0xf]
      %v583 = vld [vmem:[%s3 + $0x30] sm:$0xf]
      %v584 = vld [vmem:[%s3 + $0x34] sm:$0xf]
      %v585 = vld [vmem:[%s3 + $0x38] sm:$0xf]
      %v586 = vld [vmem:[%s3 + $0x3c] sm:$0xf]
      %v587 = vld [vmem:[%s4] sm:$0x1]
      %v589 = vlaneseq
      %v590 = vshrl.u32 %v589, 7
      %v591 = vsub.s32 0, %v590
      %v592 = vrot.slane %v587, %v591
      %v610 = vunpack.c.l.b16 %v571
      %v611 = vunpack.c.l.b16 %v572
      %v612 = vunpack.c.l.b16 %v573
      %v613 = vunpack.c.l.b16 %v574
      %v614 = vunpack.c.l.b16 %v575
      %v615 = vunpack.c.l.b16 %v576
      %v616 = vunpack.c.l.b16 %v577
      %v617 = vunpack.c.l.b16 %v578
      %v618 = vunpack.c.l.b16 %v579
      %v619 = vunpack.c.l.b16 %v580
      %v620 = vunpack.c.l.b16 %v581
      %v621 = vunpack.c.l.b16 %v582
      %v622 = vunpack.c.l.b16 %v583
      %v623 = vunpack.c.l.b16 %v584
      %v624 = vunpack.c.l.b16 %v585
      %v625 = vunpack.c.l.b16 %v586
      %v626 = vpack.c.b16 %v611, %v610
      %v627 = vpack.c.b16 %v613, %v612
      %v628 = vpack.c.b16 %v615, %v614
      %v629 = vpack.c.b16 %v617, %v616
      %v630 = vpack.c.b16 %v619, %v618
      %v631 = vpack.c.b16 %v621, %v620
      %v632 = vpack.c.b16 %v623, %v622
      %v633 = vpack.c.b16 %v625, %v624
      %642 = vmatprep.subr.bf16.mxu0 0
      %643 = vmatpush1.bf16.msra.mxu0 %v633
      %644 = vmatprep.subr.bf16.mxu0 0
      %645 = vmatpush1.bf16.msra.mxu0 %v632
      %646 = vmatprep.subr.bf16.mxu0 0
      %647 = vmatpush1.bf16.msra.mxu0 %v631
      %648 = vmatprep.subr.bf16.mxu0 0
      %649 = vmatpush1.bf16.msra.mxu0 %v630
      %650 = vmatprep.subr.bf16.mxu0 0
      %651 = vmatpush1.bf16.msra.mxu0 %v629
      %652 = vmatprep.subr.bf16.mxu0 0
      %653 = vmatpush1.bf16.msra.mxu0 %v628
      %654 = vmatprep.subr.bf16.mxu0 0
      %655 = vmatpush1.bf16.msra.mxu0 %v627
      %656 = vmatprep.subr.bf16.mxu0 0
      %657 = vmatpush1.bf16.msra.mxu0 %v626
      %658 = vmatprep.subr.bf16.mxu0 0
      %659 = vmatpush2.bf16.msra.mxu0 0
      %660 = vmatprep.subr.bf16.mxu0 0
      %661 = vmatpush2.bf16.msra.mxu0 0
      %662 = vmatprep.subr.bf16.mxu0 0
      %663 = vmatpush2.bf16.msra.mxu0 0
      %664 = vmatprep.subr.bf16.mxu0 0
      %665 = vmatpush2.bf16.msra.mxu0 0
      %666 = vmatprep.subr.bf16.mxu0 0
      %667 = vmatpush2.bf16.msra.mxu0 0
      %668 = vmatprep.subr.bf16.mxu0 0
      %669 = vmatpush2.bf16.msra.mxu0 0
      %670 = vmatprep.subr.bf16.mxu0 0
      %671 = vmatpush2.bf16.msra.mxu0 0
      %672 = vmatprep.subr.bf16.mxu0 0
      %673 = vmatpush2.bf16.msra.mxu0 0
      %674 = vmatprep.mubr.bf16.mxu0 0
      %675 = vmatmul.mubr.bf16.gmra.mxu0 %v567
      %v676 = vpop.f32.mrf.mxu0
      %v677 = vadd.f32 %v592, %v676
      %v678 = vpop.f32.mrf.mxu0
      %v679 = vpop.f32.mrf.mxu0
      %v680 = vadd.f32 %v592, %v679
      %v681 = vpop.f32.mrf.mxu0
      %682 = vmatprep.mubr.bf16.mxu0 0
      %683 = vmatmul.mubr.bf16.gmra.mxu0 %v568
      %v684 = vpop.f32.mrf.mxu0
      %v685 = vadd.f32 %v592, %v684
      %v686 = vpop.f32.mrf.mxu0
      %v687 = vpop.f32.mrf.mxu0
      %v688 = vadd.f32 %v592, %v687
      %v689 = vpop.f32.mrf.mxu0
      %690 = vmatprep.mubr.bf16.mxu0 0
      %691 = vmatmul.mubr.bf16.gmra.mxu0 %v569
      %v692 = vpop.f32.mrf.mxu0
      %v693 = vadd.f32 %v592, %v692
      %v694 = vpop.f32.mrf.mxu0
      %v695 = vpop.f32.mrf.mxu0
      %v696 = vadd.f32 %v592, %v695
      %v697 = vpop.f32.mrf.mxu0
      %698 = vmatprep.mubr.bf16.mxu0 0
      %699 = vmatmul.mubr.bf16.gmra.mxu0 %v570
      %v700 = vpop.f32.mrf.mxu0
      %v701 = vadd.f32 %v592, %v700
      %v702 = vpop.f32.mrf.mxu0
      %v703 = vpop.f32.mrf.mxu0
      %v704 = vadd.f32 %v592, %v703
      %v705 = vpop.f32.mrf.mxu0
      %706 = vdwg.mxu0
      %v707 = vmax.f32 %v677, 0.0
      %v708 = vmax.f32 %v680, 0.0
      %v709 = vmax.f32 %v685, 0.0
      %v710 = vmax.f32 %v688, 0.0
      %v711 = vmax.f32 %v693, 0.0
      %v712 = vmax.f32 %v696, 0.0
      %v713 = vmax.f32 %v701, 0.0
      %v714 = vmax.f32 %v704, 0.0
      %v715 = vpack.c.bf16 %v708, %v707
      %v716 = vpack.c.bf16 %v710, %v709
      %v717 = vpack.c.bf16 %v712, %v711
      %v718 = vpack.c.bf16 %v714, %v713
      %v719 = vld [vmem:[%s5] sm:$0xf]
      %v720 = vld [vmem:[%s5 + $0x4] sm:$0xf]
      %v721 = vld [vmem:[%s5 + $0x8] sm:$0xf]
      %v722 = vld [vmem:[%s5 + $0xc] sm:$0xf]
      %v723 = vld [vmem:[%s5 + $0x10] sm:$0xf]
      %v724 = vld [vmem:[%s5 + $0x14] sm:$0xf]
      %v725 = vld [vmem:[%s5 + $0x18] sm:$0xf]
      %v726 = vld [vmem:[%s5 + $0x1c] sm:$0xf]
      %v727 = vld [vmem:[%s5 + $0x20] sm:$0xf]
      %v728 = vld [vmem:[%s5 + $0x24] sm:$0xf]
      %v729 = vld [vmem:[%s5 + $0x28] sm:$0xf]
      %v730 = vld [vmem:[%s5 + $0x2c] sm:$0xf]
      %v731 = vld [vmem:[%s5 + $0x30] sm:$0xf]
      %v732 = vld [vmem:[%s5 + $0x34] sm:$0xf]
      %v733 = vld [vmem:[%s5 + $0x38] sm:$0xf]
      %v734 = vld [vmem:[%s5 + $0x3c] sm:$0xf]
      %v735 = vld [vmem:[%s6] sm:$0x1]
      %v737 = vlaneseq
      %v738 = vshrl.u32 %v737, 7
      %v739 = vsub.s32 0, %v738
      %v740 = vrot.slane %v735, %v739
      %v758 = vunpack.c.l.b16 %v719
      %v759 = vunpack.c.l.b16 %v720
      %v760 = vunpack.c.l.b16 %v721
      %v761 = vunpack.c.l.b16 %v722
      %v762 = vunpack.c.l.b16 %v723
      %v763 = vunpack.c.l.b16 %v724
      %v764 = vunpack.c.l.b16 %v725
      %v765 = vunpack.c.l.b16 %v726
      %v766 = vunpack.c.l.b16 %v727
      %v767 = vunpack.c.l.b16 %v728
      %v768 = vunpack.c.l.b16 %v729
      %v769 = vunpack.c.l.b16 %v730
      %v770 = vunpack.c.l.b16 %v731
      %v771 = vunpack.c.l.b16 %v732
      %v772 = vunpack.c.l.b16 %v733
      %v773 = vunpack.c.l.b16 %v734
      %v774 = vpack.c.b16 %v759, %v758
      %v775 = vpack.c.b16 %v761, %v760
      %v776 = vpack.c.b16 %v763, %v762
      %v777 = vpack.c.b16 %v765, %v764
      %v778 = vpack.c.b16 %v767, %v766
      %v779 = vpack.c.b16 %v769, %v768
      %v780 = vpack.c.b16 %v771, %v770
      %v781 = vpack.c.b16 %v773, %v772
      %790 = vmatprep.subr.bf16.mxu0 0
      %791 = vmatpush1.bf16.msra.mxu0 %v781
      %792 = vmatprep.subr.bf16.mxu0 0
      %793 = vmatpush1.bf16.msra.mxu0 %v780
      %794 = vmatprep.subr.bf16.mxu0 0
      %795 = vmatpush1.bf16.msra.mxu0 %v779
      %796 = vmatprep.subr.bf16.mxu0 0
      %797 = vmatpush1.bf16.msra.mxu0 %v778
      %798 = vmatprep.subr.bf16.mxu0 0
      %799 = vmatpush1.bf16.msra.mxu0 %v777
      %800 = vmatprep.subr.bf16.mxu0 0
      %801 = vmatpush1.bf16.msra.mxu0 %v776
      %802 = vmatprep.subr.bf16.mxu0 0
      %803 = vmatpush1.bf16.msra.mxu0 %v775
      %804 = vmatprep.subr.bf16.mxu0 0
      %805 = vmatpush1.bf16.msra.mxu0 %v774
      %806 = vmatprep.subr.bf16.mxu0 0
      %807 = vmatpush2.bf16.msra.mxu0 0
      %808 = vmatprep.subr.bf16.mxu0 0
      %809 = vmatpush2.bf16.msra.mxu0 0
      %810 = vmatprep.subr.bf16.mxu0 0
      %811 = vmatpush2.bf16.msra.mxu0 0
      %812 = vmatprep.subr.bf16.mxu0 0
      %813 = vmatpush2.bf16.msra.mxu0 0
      %814 = vmatprep.subr.bf16.mxu0 0
      %815 = vmatpush2.bf16.msra.mxu0 0
      %816 = vmatprep.subr.bf16.mxu0 0
      %817 = vmatpush2.bf16.msra.mxu0 0
      %818 = vmatprep.subr.bf16.mxu0 0
      %819 = vmatpush2.bf16.msra.mxu0 0
      %820 = vmatprep.subr.bf16.mxu0 0
      %821 = vmatpush2.bf16.msra.mxu0 0
      %822 = vmatprep.mubr.bf16.mxu0 0
      %823 = vmatmul.mubr.bf16.gmra.mxu0 %v715
      %v824 = vpop.f32.mrf.mxu0
      %v825 = vadd.f32 %v740, %v824
      %v826 = vpop.f32.mrf.mxu0
      %v827 = vpop.f32.mrf.mxu0
      %v828 = vadd.f32 %v740, %v827
      %v829 = vpop.f32.mrf.mxu0
      %830 = vmatprep.mubr.bf16.mxu0 0
      %831 = vmatmul.mubr.bf16.gmra.mxu0 %v716
      %v832 = vpop.f32.mrf.mxu0
      %v833 = vadd.f32 %v740, %v832
      %v834 = vpop.f32.mrf.mxu0
      %v835 = vpop.f32.mrf.mxu0
      %v836 = vadd.f32 %v740, %v835
      %v837 = vpop.f32.mrf.mxu0
      %838 = vmatprep.mubr.bf16.mxu0 0
      %839 = vmatmul.mubr.bf16.gmra.mxu0 %v717
      %v840 = vpop.f32.mrf.mxu0
      %v841 = vadd.f32 %v740, %v840
      %v842 = vpop.f32.mrf.mxu0
      %v843 = vpop.f32.mrf.mxu0
      %v844 = vadd.f32 %v740, %v843
      %v845 = vpop.f32.mrf.mxu0
      %846 = vmatprep.mubr.bf16.mxu0 0
      %847 = vmatmul.mubr.bf16.gmra.mxu0 %v718
      %v848 = vpop.f32.mrf.mxu0
      %v849 = vadd.f32 %v740, %v848
      %v850 = vpop.f32.mrf.mxu0
      %v851 = vpop.f32.mrf.mxu0
      %v852 = vadd.f32 %v740, %v851
      %v853 = vpop.f32.mrf.mxu0
      %854 = vdwg.mxu0
      %v855 = vmax.f32 %v825, 0.0
      %v856 = vmax.f32 %v828, 0.0
      %v857 = vmax.f32 %v833, 0.0
      %v858 = vmax.f32 %v836, 0.0
      %v859 = vmax.f32 %v841, 0.0
      %v860 = vmax.f32 %v844, 0.0
      %v861 = vmax.f32 %v849, 0.0
      %v862 = vmax.f32 %v852, 0.0
      %863 = vxpose.xlu0.b32.start [1/16] %v855, 128
      %864 = vxpose.xlu0.b32.cont [2/16] %v856, 128
      %865 = vxpose.xlu0.b32.cont [3/16] %v857, 128
      %866 = vxpose.xlu0.b32.cont [4/16] %v858, 128
      %867 = vxpose.xlu0.b32.cont [5/16] %v859, 128
      %868 = vxpose.xlu0.b32.cont [6/16] %v860, 128
      %869 = vxpose.xlu0.b32.cont [7/16] %v861, 128
      %870 = vxpose.xlu0.b32.cont [8/16] %v862, 128
      %871 = vxpose.xlu0.b32.cont [9/16] 0.0, 128
      %872 = vxpose.xlu0.b32.cont [10/16] 0.0, 128
      %873 = vxpose.xlu0.b32.cont [11/16] 0.0, 128
      %874 = vxpose.xlu0.b32.cont [12/16] 0.0, 128
      %875 = vxpose.xlu0.b32.cont [13/16] 0.0, 128
      %876 = vxpose.xlu0.b32.cont [14/16] 0.0, 128
      %877 = vxpose.xlu0.b32.cont [15/16] 0.0, 128
      %878 = vxpose.xlu0.b32.end [16/16] 0.0, 128
      %v879 = vpop.trf.xlu0
      %v880 = vpop.trf.xlu0
      %v881 = vpop.trf.xlu0
      %v882 = vpop.trf.xlu0
      %v883 = vpop.trf.xlu0
      %v884 = vpop.trf.xlu0
      %v885 = vpop.trf.xlu0
      %v886 = vpop.trf.xlu0
      %v887 = vpop.trf.xlu0
      %v888 = vpop.trf.xlu0
      %v889 = vpop.trf.xlu0
      %v890 = vpop.trf.xlu0
      %v891 = vpop.trf.xlu0
      %v892 = vpop.trf.xlu0
      %v893 = vpop.trf.xlu0
      %v894 = vpop.trf.xlu0
      %895 = vst.msk [vmem:[%s406] sm:$0xff] %vm481, %v879
      %896 = vst.msk [vmem:[%s406 + $0x8] sm:$0xff] %vm481, %v880
      %897 = vst.msk [vmem:[%s406 + $0x10] sm:$0xff] %vm481, %v881
      %898 = vst.msk [vmem:[%s406 + $0x18] sm:$0xff] %vm481, %v882
      %v899 = vld [vmem:[%s7] sm:$0xf]
      %v900 = vpack.c.bf16 %v880, %v879
      %v901 = vpack.c.bf16 %v882, %v881
      %v902 = vld [vmem:[%s8] sm:$0xff]
      %904 = vset.pattern.permute.xlu0 0
      %905 = vperm.xlu0 %904, %v902
      %v906 = vpop.permute.xlu0 %905
      %vm908 = vcmask 261120
      %v910 = vsel %vm908, %v899, 0
      %912 = vmatprep.subr.bf16.mxu0 0
      %913 = vmatpush1.bf16.msra.mxu0 0
      %914 = vmatprep.subr.bf16.mxu0 0
      %915 = vmatpush1.bf16.msra.mxu0 0
      %916 = vmatprep.subr.bf16.mxu0 0
      %917 = vmatpush1.bf16.msra.mxu0 0
      %918 = vmatprep.subr.bf16.mxu0 0
      %919 = vmatpush1.bf16.msra.mxu0 0
      %920 = vmatprep.subr.bf16.mxu0 0
      %921 = vmatpush1.bf16.msra.mxu0 0
      %922 = vmatprep.subr.bf16.mxu0 0
      %923 = vmatpush1.bf16.msra.mxu0 0
      %924 = vmatprep.subr.bf16.mxu0 0
      %925 = vmatpush1.bf16.msra.mxu0 %v901
      %926 = vmatprep.subr.bf16.mxu0 0
      %927 = vmatpush1.bf16.msra.mxu0 %v900
      %928 = vmatprep.subr.bf16.mxu0 0
      %929 = vmatpush2.bf16.msra.mxu0 0
      %930 = vmatprep.subr.bf16.mxu0 0
      %931 = vmatpush2.bf16.msra.mxu0 0
      %932 = vmatprep.subr.bf16.mxu0 0
      %933 = vmatpush2.bf16.msra.mxu0 0
      %934 = vmatprep.subr.bf16.mxu0 0
      %935 = vmatpush2.bf16.msra.mxu0 0
      %936 = vmatprep.subr.bf16.mxu0 0
      %937 = vmatpush2.bf16.msra.mxu0 0
      %938 = vmatprep.subr.bf16.mxu0 0
      %939 = vmatpush2.bf16.msra.mxu0 0
      %940 = vmatprep.subr.bf16.mxu0 0
      %941 = vmatpush2.bf16.msra.mxu0 0
      %942 = vmatprep.subr.bf16.mxu0 0
      %943 = vmatpush2.bf16.msra.mxu0 0
      %944 = vmatprep.mubr.bf16.mxu0 0
      %945 = vmatmul.mubr.bf16.gmra.mxu0 %v910
      %v946 = vpop.f32.mrf.mxu0
      %v947 = vadd.f32 %v906, %v946
      %v948 = vpop.f32.mrf.mxu0
      %v949 = vpop.f32.mrf.mxu0
      %v950 = vpop.f32.mrf.mxu0
      %951 = vdwg.mxu0
      %v952 = vpack.c.bf16 %v947, %v947
      %vm953 = vcmask 516096
      %954 = vst.msk [vmem:[%s412] sm:$0x1] %vm953, %v952
      %p955 = scmp.lt.s32.totalorder %s26, 1
      %s956 = scalar_select %p955, %s26, 1
      %p957 = scmp.lt.s32.totalorder %s27, 0
      %s958 = scalar_select %p957, %s27, 0
      %s959 = smul.addr %s956, 4
      %s960 = sadd.s32 %s958, %s959
      %s961 = smul.addr %s960, 8
      %s962 = scalar_lea.vmem %s9, %s961
      %p963 = scmp.lt.s32.totalorder %s26, 1
      %s964 = scalar_select %p963, %s26, 1
      %p965 = scmp.lt.s32.totalorder %s27, 0
      %s966 = scalar_select %p965, %s27, 0
      %s967 = sadd.s32 %s966, %s964
      %s968 = scalar_lea.vmem %s10, %s967
      // Predicated region
      $region57: #{qtseg_forward.2} parent=55 // pred_check
        %p969 = pneg %p250
      $region58: #{qtseg_forward.2} parent=55 // pred_check_branch
        %971 = sbr.rel (%p969) target = $region60
      $region59: #{qtseg_forward.2} parent=55 // pred_region
        _
      $region60: #{qtseg_forward.2} parent=55 // pred_fallthru
        _
      // Predicated region
      $region61: #{qtseg_forward.2} parent=55 // pred_check
        %p972 = pneg %p278
      $region62: #{qtseg_forward.2} parent=55 // pred_check_branch
        %974 = sbr.rel (%p972) target = $region64
      $region63: #{qtseg_forward.2} parent=55 // pred_region
        _
      $region64: #{qtseg_forward.2} parent=55 // pred_fallthru
        _
    $region56: #{qtseg_forward.2} parent=5 // pred_fallthru
      _
    %p975 = scmp.le.s32.totalorder 2, %s17
    // Predicated region
    $region65: #{qtseg_forward.2} parent=5 // pred_check
      %p976 = pneg %p975
    $region66: #{qtseg_forward.2} parent=5 // pred_check_branch
      %978 = sbr.rel (%p976) target = $region68
    $region67: #{qtseg_forward.2} parent=5 // pred_region
      %s979 = ssub.s32 %s17, 2
      // Predicated region
      $region69: #{qtseg_forward.2} parent=67 // pred_check
        %p980 = pneg %p256
      $region70: #{qtseg_forward.2} parent=67 // pred_check_branch
        %982 = sbr.rel (%p980) target = $region72
      $region71: #{qtseg_forward.2} parent=67 // pred_region
        %p983 = scmp.lt.s32.totalorder %s28, 1
        %s984 = scalar_select %p983, %s28, 1
        %p985 = scmp.lt.s32.totalorder %s29, 0
        %s986 = scalar_select %p985, %s29, 0
        %s987 = smul.addr %s984, 4
        %s988 = sadd.s32 %s986, %s987
        %s989 = smul.addr %s988, 8
        %s990 = scalar_lea.vmem %s9, %s989
      $region72: #{qtseg_forward.2} parent=67 // pred_fallthru
        _
      // Predicated region
      $region73: #{qtseg_forward.2} parent=67 // pred_check
        %p991 = pneg %p284
      $region74: #{qtseg_forward.2} parent=67 // pred_check_branch
        %993 = sbr.rel (%p991) target = $region76
      $region75: #{qtseg_forward.2} parent=67 // pred_region
        %p994 = scmp.lt.s32.totalorder %s28, 1
        %s995 = scalar_select %p994, %s28, 1
        %p996 = scmp.lt.s32.totalorder %s29, 0
        %s997 = scalar_select %p996, %s29, 0
        %s998 = sadd.s32 %s997, %s995
        %s999 = scalar_lea.vmem %s10, %s998
      $region76: #{qtseg_forward.2} parent=67 // pred_fallthru
        _
    $region68: #{qtseg_forward.2} parent=5 // pred_fallthru
      _
  $region6: #{qtseg_forward.2} parent=0 // loop_footer
    %s21 = sadd.s32 1, %s17
  $region7: #{qtseg_forward.2} parent=0 // loop_footer_branch
    %16 = sbr.rel target = $region3
  $region8: #{qtseg_forward.2} parent=0 // loop_exit
    _

</llo_original>
